<compile_context>
chip_gen: v6e
topology: v6e:2x2x1
jax: 0.10.0
libtpu: 0.0.40
codegen_flags: <defaults>
</compile_context>

<pallas_src>
import functools

import jax
import jax.numpy as jnp
from jax import lax
from jax.experimental import pallas as pl
from jax.experimental.pallas import tpu as pltpu

_LANES = 128  # lane-dense augmented width; column M carries the time derivative


def _gram_kernel(theta_ref, dt_ref, hh_ref, hl_ref, ahi_ref, alo_ref, *,
                 n_rows, row_tile, n_terms, steps_per_split, needs_mask):
    """Accumulates the split-f32 Gram of the augmented matrix [thetas | dt | 0]."""
    c = pl.program_id(0)   # reduction split ("parallel" -> a core on v7x)
    i = pl.program_id(1)   # N-reduction step within the split ("arbitrary")

    @pl.when(i == 0)
    def _init():
        hh_ref[...] = jnp.zeros_like(hh_ref)
        hl_ref[...] = jnp.zeros_like(hl_ref)
        # Zero the pad lanes once per split; only lanes [0, n_terms] are ever
        # rewritten below, so the padding stays zero for the whole reduction.
        ahi_ref[...] = jnp.zeros_like(ahi_ref)
        alo_ref[...] = jnp.zeros_like(alo_ref)

    theta = theta_ref[...]   # (row_tile, n_terms) f32
    dt = dt_ref[...]         # (row_tile, 1) f32

    if needs_mask:
        # Ragged last tile / duplicated clamped tiles contribute zero.
        row0 = (c * steps_per_split + i) * row_tile
        trow = row0 + lax.broadcasted_iota(jnp.int32, (row_tile, n_terms), 0)
        drow = row0 + lax.broadcasted_iota(jnp.int32, (row_tile, 1), 0)
        theta = jnp.where(trow < n_rows, theta, 0.0)
        dt = jnp.where(drow < n_rows, dt, 0.0)

    # Split-f32 operands: x = hi + lo with hi, lo in bf16 ("bf16x3" accuracy).
    th_hi = theta.astype(jnp.bfloat16)
    th_lo = (theta - th_hi.astype(jnp.float32)).astype(jnp.bfloat16)
    dt_hi = dt.astype(jnp.bfloat16)
    dt_lo = (dt - dt_hi.astype(jnp.float32)).astype(jnp.bfloat16)

    m = n_terms
    ahi_ref[:, :m] = th_hi
    ahi_ref[:, m:m + 1] = dt_hi
    alo_ref[:, :m] = th_lo
    alo_ref[:, m:m + 1] = dt_lo

    a_hi = ahi_ref[...]      # (row_tile, 128) bf16, lane dense
    a_lo = alo_ref[...]
    dims = (((0,), (0,)), ((), ()))   # contract over the sample (sublane) axis
    # Lo^T Hi = (Hi^T Lo)^T and Lo^T Lo is dropped, so full ~f32 accuracy costs
    # only two bf16 MXU passes per tile (symmetrization happens in the wrapper).
    hh_ref[...] += lax.dot_general(a_hi, a_hi, dims,
                                   preferred_element_type=jnp.float32)
    hl_ref[...] += lax.dot_general(a_hi, a_lo, dims,
                                   preferred_element_type=jnp.float32)


def _augmented_gram_pallas(thetas, time_derivs, *, row_tile=2048, num_splits=2):
    """(128, 128) Gram of [thetas | dt | 0-pad], computed with the Pallas kernel."""
    thetas = jnp.asarray(thetas, jnp.float32)
    dt = jnp.asarray(time_derivs, jnp.float32).reshape(-1, 1)
    n, m = thetas.shape
    if m >= _LANES:
        # TODO(synk): libraries with >= 128 terms need a second lane block.
        raise ValueError(f"library dimension {m} must be < {_LANES}")

    # Row tile: big enough to amortize per-step overhead, multiple of 16 rows.
    tn = min(row_tile, n)
    tn = max(16, ((tn + 15) // 16) * 16)
    steps_total = pl.cdiv(n, tn)
    splits = max(1, min(num_splits, steps_total))
    sps = pl.cdiv(steps_total, splits)
    needs_mask = (splits * sps * tn) != n
    last_block = steps_total - 1

    def in_map(c, i):
        # Clamp so no block is fully out of bounds; duplicated / ragged rows
        # are zeroed by the in-kernel mask.
        return (jnp.minimum(c * sps + i, last_block), 0)

    kernel = functools.partial(
        _gram_kernel, n_rows=n, row_tile=tn, n_terms=m,
        steps_per_split=sps, needs_mask=needs_mask)

    flops = 2 * 2 * (splits * sps * tn) * _LANES * _LANES  # 2 bf16 passes / tile
    bytes_accessed = n * (m + 1) * 4 + 2 * splits * _LANES * _LANES * 4

    hh, hl = pl.pallas_call(
        kernel,
        out_shape=(
            jax.ShapeDtypeStruct((splits, _LANES, _LANES), jnp.float32),
            jax.ShapeDtypeStruct((splits, _LANES, _LANES), jnp.float32),
        ),
        grid=(splits, sps),
        in_specs=[
            pl.BlockSpec((tn, m), in_map),   # last dim == full array dim (legal)
            pl.BlockSpec((tn, 1), in_map),
        ],
        out_specs=(
            pl.BlockSpec((None, _LANES, _LANES), lambda c, i: (c, 0, 0)),
            pl.BlockSpec((None, _LANES, _LANES), lambda c, i: (c, 0, 0)),
        ),
        scratch_shapes=[
            pltpu.VMEM((tn, _LANES), jnp.bfloat16),   # augmented hi tile
            pltpu.VMEM((tn, _LANES), jnp.bfloat16),   # augmented lo tile
        ],
        compiler_params=pltpu.CompilerParams(
            dimension_semantics=("parallel", "arbitrary"),
            vmem_limit_bytes=32 * 1024 * 1024,
        ),
        cost_estimate=pl.CostEstimate(flops=flops, transcendentals=0,
                                      bytes_accessed=bytes_accessed),
    )(thetas, dt)

    # Symmetrize the dropped transpose term and reduce the per-split partials.
    gram = hh + hl + jnp.swapaxes(hl, 1, 2)
    return jnp.sum(gram, axis=0)          # (128, 128)


def _augmented_gram_reference(thetas, time_derivs):
    """Full-precision XLA reference (also the fast path for tiny problems)."""
    thetas = jnp.asarray(thetas, jnp.float32)
    dt = jnp.asarray(time_derivs, jnp.float32).reshape(-1, 1)
    aug = jnp.concatenate([thetas, dt], axis=1)
    return jnp.einsum("ni,nj->ij", aug, aug, precision=lax.Precision.HIGHEST)


class PallasEstimator:
    """JAX/Pallas port of Estimator.forward.

    The abstract `fit` is realised as deterministic ridge least-squares with
    hard thresholding, built from the normal-equation pieces produced by the
    Pallas Gram kernel.
    """

    def __init__(self, threshold: float = 0.1, ridge: float = 1e-6,
                 use_pallas=None, row_tile: int = 2048, num_splits: int = 2):
        self.threshold = threshold
        self.ridge = ridge
        self.use_pallas = use_pallas      # None = auto (size-based)
        self.row_tile = row_tile
        self.num_splits = num_splits
        self.coeff_vectors = None

    def fit(self, gram, xty):
        # TODO(synk): `fit` is abstract in the reference module; this is a
        # concrete ridge-LSQ + hard-threshold realisation on the normal eqs.
        m = gram.shape[0]
        coeffs = jnp.linalg.solve(
            gram + self.ridge * jnp.eye(m, dtype=gram.dtype), xty)[:, 0]
        return jnp.where(jnp.abs(coeffs) >= self.threshold, coeffs, 0.0)

    def forward(self, thetas, time_derivs):
        n, m = thetas.shape
        use_pallas = self.use_pallas
        if use_pallas is None:
            # Tiny problems: pallas_call launch / grid overhead dominates,
            # a fused XLA einsum is faster.
            use_pallas = n * (m + 1) * 4 >= (1 << 20)

        if use_pallas:
            gram_aug = _augmented_gram_pallas(
                thetas, time_derivs, row_tile=self.row_tile,
                num_splits=self.num_splits)
        else:
            gram_aug = _augmented_gram_reference(thetas, time_derivs)

        gram = gram_aug[:m, :m]            # thetas^T thetas
        xty = gram_aug[:m, m:m + 1]        # thetas^T time_derivs

        # Norms fall out of the Gram diagonal; the reference's normalized
        # copies are never consumed downstream so they are not materialized.
        col_norms = jnp.sqrt(jnp.diagonal(gram))      # ||thetas[:, j]||
        dt_norm = jnp.sqrt(gram_aug[m, m])            # ||time_derivs||
        del col_norms, dt_norm  # parity with the reference's unused locals

        coeffs = self.fit(gram, xty)                  # (M,)
        self.coeff_vectors = coeffs[:, None]          # (M, 1)
        sparsity_masks = jnp.squeeze(self.coeff_vectors != 0.0)  # (M,) bool
        return sparsity_masks

    __call__ = forward


if __name__ == "__main__":
    key = jax.random.PRNGKey(0)
    k1, k2 = jax.random.split(key)

    # Ragged N exercises the in-kernel masking, the clamped index_map and the
    # 2-way reduction split even at demo size.
    N, M = 500, 16
    thetas = jax.random.normal(k1, (N, M), dtype=jnp.float32)
    noise = 0.01 * jax.random.normal(k2, (N, 1), dtype=jnp.float32)
    # time derivative = sparse combination of library columns (+ small noise)
    time_derivs = 2.0 * thetas[:, 0:1] - 1.5 * thetas[:, 3:4] + noise  # (N, 1)

    # Small row_tile so the tiny demo still runs a multi-step, 2-split grid.
    est = PallasEstimator(threshold=0.1, use_pallas=True,
                          row_tile=128, num_splits=2)
    mask = jax.block_until_ready(est(thetas, time_derivs))

    assert mask.shape == (M,) and mask.dtype == jnp.bool_
    assert bool(mask[0]) and bool(mask[3])          # active terms recovered
    assert est.coeff_vectors.shape == (M, 1)

    # Cross-check the Pallas split-f32 Gram against a full-precision reference.
    gram_pl = _augmented_gram_pallas(thetas, time_derivs,
                                     row_tile=128, num_splits=2)
    gram_pl = jax.block_until_ready(gram_pl)
    gram_ref = _augmented_gram_reference(thetas, time_derivs)
    assert jnp.allclose(gram_pl[:M + 1, :M + 1], gram_ref,
                        rtol=1e-3, atol=5e-2)

    print("KERNEL_OK")
</pallas_src>

<mosaic_0001>
module attributes {stable_mosaic.version = 11 : i64} {
  func.func @_gram_kernel(%arg0: i32, %arg1: i32, %arg2: memref<128x16xf32, #tpu.memory_space<vmem>>, %arg3: memref<128x1xf32, #tpu.memory_space<vmem>>, %arg4: memref<1x128x128xf32, #tpu.memory_space<vmem>>, %arg5: memref<1x128x128xf32, #tpu.memory_space<vmem>>, %arg6: memref<128x128xbf16, #tpu.memory_space<vmem>>, %arg7: memref<128x128xbf16, #tpu.memory_space<vmem>>) attributes {dimension_semantics = [#tpu.dimension_semantics<parallel>, #tpu.dimension_semantics<arbitrary>], iteration_bounds = array<i64: 2, 2>, scalar_prefetch = 0 : i64, scratch_operands = 2 : i64, tpu.core_type = #tpu.core_type<tc>, window_params = [{transform_indices = @transform_0, window_bounds = array<i64: 128, 16>}, {transform_indices = @transform_1, window_bounds = array<i64: 128, 1>}, {transform_indices = @transform_2, window_bounds = array<i64: 1, 128, 128>}, {transform_indices = @transform_3, window_bounds = array<i64: 1, 128, 128>}]} {
    %c0_i32 = arith.constant 0 : i32
    %0 = arith.cmpi eq, %arg1, %c0_i32 : i32
    %1 = arith.extui %0 : i1 to i32
    %c0_i32_0 = arith.constant 0 : i32
    %2 = arith.cmpi ne, %1, %c0_i32_0 : i32
    scf.if %2 {
      %cst_31 = arith.constant 0.000000e+00 : f32
      %50 = vector.broadcast %cst_31 : f32 to vector<128x128xf32>
      %c0_32 = arith.constant 0 : index
      %c0_33 = arith.constant 0 : index
      %c0_34 = arith.constant 0 : index
      %51 = vector.load %arg4[%c0_32, %c0_33, %c0_34] : memref<1x128x128xf32, #tpu.memory_space<vmem>>, vector<1x128x128xf32>
      %52 = vector.shape_cast %51 : vector<1x128x128xf32> to vector<128x128xf32>
      %53 = vector.shape_cast %50 : vector<128x128xf32> to vector<1x128x128xf32>
      tpu.vector_store %arg4[%c0_32, %c0_33, %c0_34], %53 {strides = array<i32>} : memref<1x128x128xf32, #tpu.memory_space<vmem>>, vector<1x128x128xf32>,
      %cst_35 = arith.constant 0.000000e+00 : f32
      %54 = vector.broadcast %cst_35 : f32 to vector<128x128xf32>
      %c0_36 = arith.constant 0 : index
      %c0_37 = arith.constant 0 : index
      %c0_38 = arith.constant 0 : index
      %55 = vector.load %arg5[%c0_36, %c0_37, %c0_38] : memref<1x128x128xf32, #tpu.memory_space<vmem>>, vector<1x128x128xf32>
      %56 = vector.shape_cast %55 : vector<1x128x128xf32> to vector<128x128xf32>
      %57 = vector.shape_cast %54 : vector<128x128xf32> to vector<1x128x128xf32>
      tpu.vector_store %arg5[%c0_36, %c0_37, %c0_38], %57 {strides = array<i32>} : memref<1x128x128xf32, #tpu.memory_space<vmem>>, vector<1x128x128xf32>,
      %cst_39 = arith.constant 0.000000e+00 : bf16
      %58 = vector.broadcast %cst_39 : bf16 to vector<128x128xbf16>
      %c0_40 = arith.constant 0 : index
      %c0_41 = arith.constant 0 : index
      %59 = vector.load %arg6[%c0_40, %c0_41] : memref<128x128xbf16, #tpu.memory_space<vmem>>, vector<128x128xbf16>
      tpu.vector_store %arg6[%c0_40, %c0_41], %58 {strides = array<i32>} : memref<128x128xbf16, #tpu.memory_space<vmem>>, vector<128x128xbf16>,
      %cst_42 = arith.constant 0.000000e+00 : bf16
      %60 = vector.broadcast %cst_42 : bf16 to vector<128x128xbf16>
      %c0_43 = arith.constant 0 : index
      %c0_44 = arith.constant 0 : index
      %61 = vector.load %arg7[%c0_43, %c0_44] : memref<128x128xbf16, #tpu.memory_space<vmem>>, vector<128x128xbf16>
      tpu.vector_store %arg7[%c0_43, %c0_44], %60 {strides = array<i32>} : memref<128x128xbf16, #tpu.memory_space<vmem>>, vector<128x128xbf16>,
    } else {
    }
    %c0 = arith.constant 0 : index
    %c0_1 = arith.constant 0 : index
    %3 = vector.load %arg2[%c0, %c0_1] : memref<128x16xf32, #tpu.memory_space<vmem>>, vector<128x16xf32>
    %c0_2 = arith.constant 0 : index
    %c0_3 = arith.constant 0 : index
    %4 = vector.load %arg3[%c0_2, %c0_3] : memref<128x1xf32, #tpu.memory_space<vmem>>, vector<128x1xf32>
    %c2_i32 = arith.constant 2 : i32
    %5 = arith.muli %arg0, %c2_i32 : i32
    %6 = arith.addi %5, %arg1 : i32
    %c128_i32 = arith.constant 128 : i32
    %7 = arith.muli %6, %c128_i32 : i32
    %8 = tpu.iota {dimensions = array<i32: 0>} : vector<128x16xi32>
    %9 = vector.broadcast %7 : i32 to vector<128x16xi32>
    %10 = arith.addi %9, %8 : vector<128x16xi32>
    %11 = tpu.iota {dimensions = array<i32: 0>} : vector<128x1xi32>
    %12 = vector.broadcast %7 : i32 to vector<128x1xi32>
    %13 = arith.addi %12, %11 : vector<128x1xi32>
    %c500_i32 = arith.constant 500 : i32
    %14 = vector.broadcast %c500_i32 : i32 to vector<128x16xi32>
    %15 = arith.cmpi slt, %10, %14 : vector<128x16xi32>
    %cst = arith.constant 0.000000e+00 : f32
    %16 = vector.broadcast %cst : f32 to vector<128x16xf32>
    %17 = arith.select %15, %3, %16 : vector<128x16xi1>, vector<128x16xf32>
    %c500_i32_4 = arith.constant 500 : i32
    %18 = vector.broadcast %c500_i32_4 : i32 to vector<128x1xi32>
    %19 = arith.cmpi slt, %13, %18 : vector<128x1xi32>
    %cst_5 = arith.constant 0.000000e+00 : f32
    %20 = vector.broadcast %cst_5 : f32 to vector<128x1xf32>
    %21 = arith.select %19, %4, %20 : vector<128x1xi1>, vector<128x1xf32>
    %22 = arith.truncf %17 : vector<128x16xf32> to vector<128x16xbf16>
    %23 = arith.extf %22 : vector<128x16xbf16> to vector<128x16xf32>
    %24 = arith.subf %17, %23 : vector<128x16xf32>
    %25 = arith.truncf %24 : vector<128x16xf32> to vector<128x16xbf16>
    %26 = arith.truncf %21 : vector<128x1xf32> to vector<128x1xbf16>
    %27 = arith.extf %26 : vector<128x1xbf16> to vector<128x1xf32>
    %28 = arith.subf %21, %27 : vector<128x1xf32>
    %29 = arith.truncf %28 : vector<128x1xf32> to vector<128x1xbf16>
    %c0_6 = arith.constant 0 : index
    %c0_7 = arith.constant 0 : index
    %30 = vector.load %arg6[%c0_6, %c0_7] : memref<128x128xbf16, #tpu.memory_space<vmem>>, vector<128x16xbf16>
    tpu.vector_store %arg6[%c0_6, %c0_7], %22 {strides = array<i32>} : memref<128x128xbf16, #tpu.memory_space<vmem>>, vector<128x16xbf16>,
    %c0_8 = arith.constant 0 : index
    %c16 = arith.constant 16 : index
    %31 = vector.load %arg6[%c0_8, %c16] : memref<128x128xbf16, #tpu.memory_space<vmem>>, vector<128x1xbf16>
    tpu.vector_store %arg6[%c0_8, %c16], %26 {strides = array<i32>} : memref<128x128xbf16, #tpu.memory_space<vmem>>, vector<128x1xbf16>,
    %c0_9 = arith.constant 0 : index
    %c0_10 = arith.constant 0 : index
    %32 = vector.load %arg7[%c0_9, %c0_10] : memref<128x128xbf16, #tpu.memory_space<vmem>>, vector<128x16xbf16>
    tpu.vector_store %arg7[%c0_9, %c0_10], %25 {strides = array<i32>} : memref<128x128xbf16, #tpu.memory_space<vmem>>, vector<128x16xbf16>,
    %c0_11 = arith.constant 0 : index
    %c16_12 = arith.constant 16 : index
    %33 = vector.load %arg7[%c0_11, %c16_12] : memref<128x128xbf16, #tpu.memory_space<vmem>>, vector<128x1xbf16>
    tpu.vector_store %arg7[%c0_11, %c16_12], %29 {strides = array<i32>} : memref<128x128xbf16, #tpu.memory_space<vmem>>, vector<128x1xbf16>,
    %c0_13 = arith.constant 0 : index
    %c0_14 = arith.constant 0 : index
    %34 = vector.load %arg6[%c0_13, %c0_14] : memref<128x128xbf16, #tpu.memory_space<vmem>>, vector<128x128xbf16>
    %c0_15 = arith.constant 0 : index
    %c0_16 = arith.constant 0 : index
    %35 = vector.load %arg7[%c0_15, %c0_16] : memref<128x128xbf16, #tpu.memory_space<vmem>>, vector<128x128xbf16>
    %c0_17 = arith.constant 0 : index
    %c0_18 = arith.constant 0 : index
    %c0_19 = arith.constant 0 : index
    %36 = vector.load %arg4[%c0_17, %c0_18, %c0_19] : memref<1x128x128xf32, #tpu.memory_space<vmem>>, vector<1x128x128xf32>
    %37 = vector.shape_cast %36 : vector<1x128x128xf32> to vector<128x128xf32>
    %cst_20 = arith.constant dense<0.000000e+00> : vector<128x128xf32>
    %38 = tpu.matmul %34, %34, %cst_20 {dimension_numbers = #tpu.dot_dimension_numbers<[0], [0], [1], [1], [0, 1, 1, 1], [], []>} : vector<128x128xbf16>, vector<128x128xbf16>, vector<128x128xf32> -> vector<128x128xf32>
    %39 = arith.addf %37, %38 : vector<128x128xf32>
    %c0_21 = arith.constant 0 : index
    %c0_22 = arith.constant 0 : index
    %c0_23 = arith.constant 0 : index
    %40 = vector.load %arg4[%c0_21, %c0_22, %c0_23] : memref<1x128x128xf32, #tpu.memory_space<vmem>>, vector<1x128x128xf32>
    %41 = vector.shape_cast %40 : vector<1x128x128xf32> to vector<128x128xf32>
    %42 = vector.shape_cast %39 : vector<128x128xf32> to vector<1x128x128xf32>
    tpu.vector_store %arg4[%c0_21, %c0_22, %c0_23], %42 {strides = array<i32>} : memref<1x128x128xf32, #tpu.memory_space<vmem>>, vector<1x128x128xf32>,
    %c0_24 = arith.constant 0 : index
    %c0_25 = arith.constant 0 : index
    %c0_26 = arith.constant 0 : index
    %43 = vector.load %arg5[%c0_24, %c0_25, %c0_26] : memref<1x128x128xf32, #tpu.memory_space<vmem>>, vector<1x128x128xf32>
    %44 = vector.shape_cast %43 : vector<1x128x128xf32> to vector<128x128xf32>
    %cst_27 = arith.constant dense<0.000000e+00> : vector<128x128xf32>
    %45 = tpu.matmul %34, %35, %cst_27 {dimension_numbers = #tpu.dot_dimension_numbers<[0], [0], [1], [1], [0, 1, 1, 1], [], []>} : vector<128x128xbf16>, vector<128x128xbf16>, vector<128x128xf32> -> vector<128x128xf32>
    %46 = arith.addf %44, %45 : vector<128x128xf32>
    %c0_28 = arith.constant 0 : index
    %c0_29 = arith.constant 0 : index
    %c0_30 = arith.constant 0 : index
    %47 = vector.load %arg5[%c0_28, %c0_29, %c0_30] : memref<1x128x128xf32, #tpu.memory_space<vmem>>, vector<1x128x128xf32>
    %48 = vector.shape_cast %47 : vector<1x128x128xf32> to vector<128x128xf32>
    %49 = vector.shape_cast %46 : vector<128x128xf32> to vector<1x128x128xf32>
    tpu.vector_store %arg5[%c0_28, %c0_29, %c0_30], %49 {strides = array<i32>} : memref<1x128x128xf32, #tpu.memory_space<vmem>>, vector<1x128x128xf32>,
    return
  }
  func.func @transform_0(%arg0: i32, %arg1: i32) -> (i32, i32) {
    %c2_i32 = arith.constant 2 : i32
    %0 = arith.muli %arg0, %c2_i32 : i32
    %1 = arith.addi %0, %arg1 : i32
    %c3_i32 = arith.constant 3 : i32
    %2 = arith.minsi %1, %c3_i32 : i32
    %c0_i32 = arith.constant 0 : i32
    %c0_i32_0 = arith.constant 0 : i32
    return %2, %c0_i32 : i32, i32
  }
  func.func @transform_1(%arg0: i32, %arg1: i32) -> (i32, i32) {
    %c2_i32 = arith.constant 2 : i32
    %0 = arith.muli %arg0, %c2_i32 : i32
    %1 = arith.addi %0, %arg1 : i32
    %c3_i32 = arith.constant 3 : i32
    %2 = arith.minsi %1, %c3_i32 : i32
    %c0_i32 = arith.constant 0 : i32
    %c0_i32_0 = arith.constant 0 : i32
    return %2, %c0_i32 : i32, i32
  }
  func.func @transform_2(%arg0: i32, %arg1: i32) -> (i32, i32, i32) {
    %c0_i32 = arith.constant 0 : i32
    %c0_i32_0 = arith.constant 0 : i32
    %c0_i32_1 = arith.constant 0 : i32
    return %arg0, %c0_i32, %c0_i32_0 : i32, i32, i32
  }
  func.func @transform_3(%arg0: i32, %arg1: i32) -> (i32, i32, i32) {
    %c0_i32 = arith.constant 0 : i32
    %c0_i32_0 = arith.constant 0 : i32
    %c0_i32_1 = arith.constant 0 : i32
    return %arg0, %c0_i32, %c0_i32_0 : i32, i32, i32
  }
}

</mosaic_0001>

<llo_original>
// kernel: tpu_custom_call.1
$region0: #{tpu_custom_call.1}
  #allocation0 [shape = 'u32[]', space=smem, size = 0x4, offset = 0x4, fixed_abs, tag = 'smem constant byte address 0x4 - core index']
  #allocation1 [shape = 'u32[144,128]{1,0:T(1,128)}', space=vmem, size = 0x12000, scoped, tag = 'internal scratch']
  #allocation2 [shape = 'bf16[128,128]{1,0:T(8,128)(2,1)}', space=vmem, size = 0x8000, scoped, tag = 'scratch operand']
  #allocation3 [shape = 'bf16[128,128]{1,0:T(8,128)(2,1)}', space=vmem, size = 0x8000, scoped, tag = 'scratch operand']
  %s0 = inlined_call_operand.vmem [shape: f32[500,16], index: 0, kind: input, shape index: {}]
  %s1 = inlined_call_operand.vmem [shape: f32[500,1], index: 1, kind: input, shape index: {}]
  %s2 = inlined_call_operand.hbm [shape: f32[2,128,128], index: 2, kind: output, shape index: {0}]
  %s3 = inlined_call_operand.hbm [shape: f32[2,128,128], index: 3, kind: output, shape index: {1}]
  %4 = xla_tuple %s2, %s3
  %s5 = sld [smem:[#allocation0]]
  $region53: #{tpu_custom_call.1} parent=0
    _
  %s7 = ssub.s32 1, %s5
  %s8 = scalar_select 0, %s7, %s5
  $region1: #{tpu_custom_call.1} parent=0
    #allocation4 [shape = 'u8[131072]{0}', space=vmem, size = 0x20000, scoped, tag = 'output window, operand 0']
    #allocation5 [shape = 's32[2]{0}', space=sflag, size = 0x8, scoped, tag = 'scoped memory for tpu_custom_call.1']
    #allocation6 [shape = 'u8[131072]{0}', space=vmem, size = 0x20000, scoped, tag = 'output window, operand 1']
    #allocation7 [shape = 's32[2]{0}', space=sflag, size = 0x8, scoped, tag = 'scoped memory for tpu_custom_call.1']
    %9 = vsyncpa [#allocation5], 0
    %s10 = scalar_lea.sflag [#allocation5], 1
    %11 = vsyncpa %s10, 0
    %12 = vsyncpa [#allocation7], 0
    %s13 = scalar_lea.sflag [#allocation7], 1
    %14 = vsyncpa %s13, 0
    loop: start=0, step=1, limit=6
    $region2: #{tpu_custom_call.1} parent=1 // loop_pre_header
      _
    $region3: #{tpu_custom_call.1} parent=1 // loop_header
      %s16 = sphi 0, %s20
      %p17 = scmp.ge.s32.totalorder %s16, 6
      %s23 = sphi 0, %s35
      %s24 = sphi 0, %s31
      %s25 = sphi 0, %s23
      %s26 = sphi 0, %s24
      %s27 = sphi 0, %s25
      %s28 = sphi 0, %s26
      %s46 = sphi 0, %s48
      %s49 = sphi 0, %s46
      %s50 = sphi 0, %s49
      %s66 = sphi 0, %s50
      %s80 = sphi 0, %s82
      %s83 = sphi 0, %s80
      %s84 = sphi 0, %s83
      %s100 = sphi 0, %s84
      %s106 = sphi 0, %s108
      %s109 = sphi 0, %s106
      %s110 = sphi 0, %s109
      %s126 = sphi 0, %s110
      %s132 = sphi 0, %s134
      %s135 = sphi 0, %s132
      %s136 = sphi 0, %s135
      %s152 = sphi 0, %s136
    $region4: #{tpu_custom_call.1} parent=1 // loop_header_branch
      %19 = sbr.rel (%p17) target = $region8
    $region5: #{tpu_custom_call.1} parent=1 // loop_body
      %s21 = ssub.s32 %s16, 1
      %s22 = ssub.s32 %s16, 2
      %s29 = sadd.s32 1, %s24
      %p30 = scmp.ge.s32.totalorder %s29, 2
      %s31 = scalar_select %p30, 0, %s29
      %s32 = sadd.s32 1, %s23
      %s33 = scalar_select %p30, %s32, %s23
      %p34 = scmp.ge.s32.totalorder %s33, 2
      %s35 = scalar_select %p34, 0, %s33
      %s36 = smul.u32 %s23, 2
      %s37 = sadd.s32 %s36, %s24
      %p38 = scmp.lt.s32.totalorder %s37, 3
      %s39 = scalar_select %p38, %s37, 3
      %s40 = smul.u32 %s35, 2
      %s41 = sadd.s32 %s40, %s31
      %p42 = scmp.lt.s32.totalorder %s41, 3
      %s43 = scalar_select %p42, %s41, 3
      %s44 = ssub.s32 %s39, %s43
      %p45 = scmp.eq.s32.totalorder %s44, 0
      %s47 = sadd.s32 %s46, 1
      %s48 = scalar_select %p45, %s46, %s47
      %p51 = pneg %p45
      %p52 = scmp.eq.s32.totalorder %s16, 3
      %p53 = por %p51, %p52
      %p54 = scmp.ne.s32.totalorder %s46, %s49
      %p55 = scmp.eq.s32.totalorder %s16, 0
      %p56 = por %p54, %p55
      %p57 = scmp.ne.s32.totalorder %s46, %s49
      %p58 = scmp.eq.s32.totalorder %s21, 3
      %p59 = por %p57, %p58
      %p60 = scmp.ne.s32.totalorder %s49, %s50
      %p61 = scmp.eq.s32.totalorder %s21, 0
      %p62 = por %p60, %p61
      %p63 = scmp.ne.s32.totalorder %s49, %s50
      %p64 = scmp.eq.s32.totalorder %s22, 3
      %p65 = por %p63, %p64
      %p67 = scmp.ne.s32.totalorder %s50, %s66
      %p68 = scmp.eq.s32.totalorder %s22, 0
      %p69 = por %p67, %p68
      %s70 = smul.u32 %s23, 2
      %s71 = sadd.s32 %s70, %s24
      %p72 = scmp.lt.s32.totalorder %s71, 3
      %s73 = scalar_select %p72, %s71, 3
      %s74 = smul.u32 %s35, 2
      %s75 = sadd.s32 %s74, %s31
      %p76 = scmp.lt.s32.totalorder %s75, 3
      %s77 = scalar_select %p76, %s75, 3
      %s78 = ssub.s32 %s73, %s77
      %p79 = scmp.eq.s32.totalorder %s78, 0
      %s81 = sadd.s32 %s80, 1
      %s82 = scalar_select %p79, %s80, %s81
      %p85 = pneg %p79
      %p86 = scmp.eq.s32.totalorder %s16, 3
      %p87 = por %p85, %p86
      %p88 = scmp.ne.s32.totalorder %s80, %s83
      %p89 = scmp.eq.s32.totalorder %s16, 0
      %p90 = por %p88, %p89
      %p91 = scmp.ne.s32.totalorder %s80, %s83
      %p92 = scmp.eq.s32.totalorder %s21, 3
      %p93 = por %p91, %p92
      %p94 = scmp.ne.s32.totalorder %s83, %s84
      %p95 = scmp.eq.s32.totalorder %s21, 0
      %p96 = por %p94, %p95
      %p97 = scmp.ne.s32.totalorder %s83, %s84
      %p98 = scmp.eq.s32.totalorder %s22, 3
      %p99 = por %p97, %p98
      %p101 = scmp.ne.s32.totalorder %s84, %s100
      %p102 = scmp.eq.s32.totalorder %s22, 0
      %p103 = por %p101, %p102
      %s104 = ssub.s32 %s23, %s35
      %p105 = scmp.eq.s32.totalorder %s104, 0
      %s107 = sadd.s32 %s106, 1
      %s108 = scalar_select %p105, %s106, %s107
      %p111 = pneg %p105
      %p112 = scmp.eq.s32.totalorder %s16, 3
      %p113 = por %p111, %p112
      %p114 = scmp.ne.s32.totalorder %s106, %s109
      %p115 = scmp.eq.s32.totalorder %s16, 0
      %p116 = por %p114, %p115
      %p117 = scmp.ne.s32.totalorder %s106, %s109
      %p118 = scmp.eq.s32.totalorder %s21, 3
      %p119 = por %p117, %p118
      %p120 = scmp.ne.s32.totalorder %s109, %s110
      %p121 = scmp.eq.s32.totalorder %s21, 0
      %p122 = por %p120, %p121
      %p123 = scmp.ne.s32.totalorder %s109, %s110
      %p124 = scmp.eq.s32.totalorder %s22, 3
      %p125 = por %p123, %p124
      %p127 = scmp.ne.s32.totalorder %s110, %s126
      %p128 = scmp.eq.s32.totalorder %s22, 0
      %p129 = por %p127, %p128
      %s130 = ssub.s32 %s23, %s35
      %p131 = scmp.eq.s32.totalorder %s130, 0
      %s133 = sadd.s32 %s132, 1
      %s134 = scalar_select %p131, %s132, %s133
      %p137 = pneg %p131
      %p138 = scmp.eq.s32.totalorder %s16, 3
      %p139 = por %p137, %p138
      %p140 = scmp.ne.s32.totalorder %s132, %s135
      %p141 = scmp.eq.s32.totalorder %s16, 0
      %p142 = por %p140, %p141
      %p143 = scmp.ne.s32.totalorder %s132, %s135
      %p144 = scmp.eq.s32.totalorder %s21, 3
      %p145 = por %p143, %p144
      %p146 = scmp.ne.s32.totalorder %s135, %s136
      %p147 = scmp.eq.s32.totalorder %s21, 0
      %p148 = por %p146, %p147
      %p149 = scmp.ne.s32.totalorder %s135, %s136
      %p150 = scmp.eq.s32.totalorder %s22, 3
      %p151 = por %p149, %p150
      %p153 = scmp.ne.s32.totalorder %s136, %s152
      %p154 = scmp.eq.s32.totalorder %s22, 0
      %p155 = por %p153, %p154
      %p156 = scmp.le.s32.totalorder 1, %s16
      %p157 = scmp.lt.s32.totalorder %s16, 5
      %p158 = pnand %p156, %p157
      %p159 = pneg %p158
      // Predicated region
      $region9: #{tpu_custom_call.1} parent=5 // pred_check
        _
      $region10: #{tpu_custom_call.1} parent=5 // pred_check_branch
        %161 = sbr.rel (%p158) target = $region12
      $region11: #{tpu_custom_call.1} parent=5 // pred_region
        %s162 = ssub.s32 %s16, 1
      $region12: #{tpu_custom_call.1} parent=5 // pred_fallthru
        _
      %p163 = scmp.lt.s32.totalorder %s16, 4
      // Predicated region
      $region13: #{tpu_custom_call.1} parent=5 // pred_check
        %p164 = pneg %p163
      $region14: #{tpu_custom_call.1} parent=5 // pred_check_branch
        %166 = sbr.rel (%p164) target = $region16
      $region15: #{tpu_custom_call.1} parent=5 // pred_region
        // Predicated region
        $region17: #{tpu_custom_call.1} parent=15 // pred_check
          %p167 = pneg %p56
        $region18: #{tpu_custom_call.1} parent=15 // pred_check_branch
          %169 = sbr.rel (%p167) target = $region20
        $region19: #{tpu_custom_call.1} parent=15 // pred_region
          %s170 = smul.u32 %s23, 2
          %s171 = sadd.s32 %s170, %s24
          %p172 = scmp.lt.s32.totalorder %s171, 3
          %s173 = scalar_select %p172, %s171, 3
          %s174 = smul.u32 16, %s173
          %s175 = ssub.s32 63, %s174
          %p176 = scmp.lt.s32.totalorder %s175, 16
          %s177 = scalar_select %p176, %s175, 16
          %s178 = smul.u32 128, %s177
          %p179 = scmp.lt.s32.totalorder %s174, 62
          %s180 = scalar_select %p179, %s174, 62
          %s181 = smul.addr %s180, 8
          %s182 = scalar_lea.vmem %s0, %s181
          %s183 = smul.u32 %s23, 2
          %s184 = sadd.s32 %s183, %s24
          %p185 = scmp.lt.s32.totalorder %s184, 3
          %s186 = scalar_select %p185, %s184, 3
          %s187 = smul.u32 16, %s186
          %s188 = ssub.s32 63, %s187
          %p189 = scmp.lt.s32.totalorder %s188, 16
          %s190 = scalar_select %p189, %s188, 16
          %s191 = smul.u32 128, %s190
        $region20: #{tpu_custom_call.1} parent=15 // pred_fallthru
          _
        // Predicated region
        $region21: #{tpu_custom_call.1} parent=15 // pred_check
          %p192 = pneg %p90
        $region22: #{tpu_custom_call.1} parent=15 // pred_check_branch
          %194 = sbr.rel (%p192) target = $region24
        $region23: #{tpu_custom_call.1} parent=15 // pred_region
          %s195 = smul.u32 %s23, 2
          %s196 = sadd.s32 %s195, %s24
          %p197 = scmp.lt.s32.totalorder %s196, 3
          %s198 = scalar_select %p197, %s196, 3
          %s199 = smul.u32 16, %s198
          %s200 = ssub.s32 63, %s199
          %p201 = scmp.lt.s32.totalorder %s200, 16
          %s202 = scalar_select %p201, %s200, 16
          %s203 = smul.u32 128, %s202
          %p204 = scmp.lt.s32.totalorder %s199, 62
          %s205 = scalar_select %p204, %s199, 62
          %s206 = smul.addr %s205, 8
          %s207 = scalar_lea.vmem %s1, %s206
          %s208 = smul.u32 %s23, 2
          %s209 = sadd.s32 %s208, %s24
          %p210 = scmp.lt.s32.totalorder %s209, 3
          %s211 = scalar_select %p210, %s209, 3
          %s212 = smul.u32 16, %s211
          %s213 = ssub.s32 63, %s212
          %p214 = scmp.lt.s32.totalorder %s213, 16
          %s215 = scalar_select %p214, %s213, 16
          %s216 = smul.u32 128, %s215
        $region24: #{tpu_custom_call.1} parent=15 // pred_fallthru
          _
      $region16: #{tpu_custom_call.1} parent=5 // pred_fallthru
        _
      %p217 = scmp.le.s32.totalorder 1, %s16
      %p218 = scmp.lt.s32.totalorder %s16, 5
      %p219 = pnand %p217, %p218
      %p220 = pneg %p219
      // Predicated region
      $region25: #{tpu_custom_call.1} parent=5 // pred_check
        _
      $region26: #{tpu_custom_call.1} parent=5 // pred_check_branch
        %222 = sbr.rel (%p219) target = $region28
      $region27: #{tpu_custom_call.1} parent=5 // pred_region
        %s223 = ssub.s32 %s16, 1
        %s224 = smul.u32 %s25, 2
        %s225 = sadd.s32 %s224, %s26
        %p226 = scmp.lt.s32.totalorder %s225, 3
        %s227 = scalar_select %p226, %s225, 3
        %s228 = smul.u32 16, %s227
        %s229 = ssub.s32 63, %s228
        %p230 = scmp.lt.s32.totalorder %s229, 16
        %s231 = scalar_select %p230, %s229, 16
        %s232 = smul.u32 128, %s231
        %p233 = scmp.lt.s32.totalorder %s228, 62
        %s234 = scalar_select %p233, %s228, 62
        %s235 = smul.addr %s234, 8
        %s236 = scalar_lea.vmem %s0, %s235
        %p237 = pneg %p62
        %p238 = pneg %p59
        %s239 = smul.u32 %s25, 2
        %s240 = sadd.s32 %s239, %s26
        %p241 = scmp.lt.s32.totalorder %s240, 3
        %s242 = scalar_select %p241, %s240, 3
        %s243 = smul.u32 16, %s242
        %s244 = ssub.s32 63, %s243
        %p245 = scmp.lt.s32.totalorder %s244, 16
        %s246 = scalar_select %p245, %s244, 16
        %s247 = smul.u32 128, %s246
        %p248 = scmp.lt.s32.totalorder %s243, 62
        %s249 = scalar_select %p248, %s243, 62
        %s250 = smul.addr %s249, 8
        %s251 = scalar_lea.vmem %s1, %s250
        %p252 = pneg %p96
        %p253 = pneg %p93
        %p254 = pneg %p122
        %p255 = pneg %p119
        %s256 = sand.u32 %s109, 1
        %s257 = scalar_lea.sflag [#allocation5], %s256
        %s258 = sand.u32 %s109, 1
        %s259 = smul.addr %s258, 128
        %s260 = scalar_lea.vmem [#allocation4], %s259
        %p261 = pneg %p148
        %p262 = pneg %p145
        %s263 = sand.u32 %s135, 1
        %s264 = scalar_lea.sflag [#allocation7], %s263
        %s265 = sand.u32 %s135, 1
        %s266 = smul.addr %s265, 128
        %s267 = scalar_lea.vmem [#allocation6], %s266
        %s268 = smul.u32 %s25, 2
        %s269 = sadd.s32 %s268, %s26
        %p270 = scmp.lt.s32.totalorder %s269, 3
        %s271 = scalar_select %p270, %s269, 3
        %s272 = smul.u32 16, %s271
        %s273 = ssub.s32 63, %s272
        %p274 = scmp.lt.s32.totalorder %s273, 16
        %s275 = scalar_select %p274, %s273, 16
        %s276 = smul.u32 128, %s275
        %p277 = scmp.lt.s32.totalorder %s272, 62
        %s278 = scalar_select %p277, %s272, 62
        %s279 = smul.addr %s278, 8
        %s280 = scalar_lea.vmem %s0, %s279
        %s281 = smul.u32 %s25, 2
        %s282 = sadd.s32 %s281, %s26
        %p283 = scmp.lt.s32.totalorder %s282, 3
        %s284 = scalar_select %p283, %s282, 3
        %s285 = smul.u32 16, %s284
        %s286 = ssub.s32 63, %s285
        %p287 = scmp.lt.s32.totalorder %s286, 16
        %s288 = scalar_select %p287, %s286, 16
        %s289 = smul.u32 128, %s288
        %s290 = smul.u32 %s25, 2
        %s291 = sadd.s32 %s290, %s26
        %p292 = scmp.lt.s32.totalorder %s291, 3
        %s293 = scalar_select %p292, %s291, 3
        %s294 = smul.u32 16, %s293
        %s295 = ssub.s32 63, %s294
        %p296 = scmp.lt.s32.totalorder %s295, 16
        %s297 = scalar_select %p296, %s295, 16
        %s298 = smul.u32 128, %s297
        %p299 = scmp.lt.s32.totalorder %s294, 62
        %s300 = scalar_select %p299, %s294, 62
        %s301 = smul.addr %s300, 8
        %s302 = scalar_lea.vmem %s1, %s301
        %s303 = smul.u32 %s25, 2
        %s304 = sadd.s32 %s303, %s26
        %p305 = scmp.lt.s32.totalorder %s304, 3
        %s306 = scalar_select %p305, %s304, 3
        %s307 = smul.u32 16, %s306
        %s308 = ssub.s32 63, %s307
        %p309 = scmp.lt.s32.totalorder %s308, 16
        %s310 = scalar_select %p309, %s308, 16
        %s311 = smul.u32 128, %s310
        %p313 = scmp.eq.s32.totalorder %s26, 0
        // Predicated region
        $region29: #{tpu_custom_call.1} parent=27 // pred_check
          %p314 = pneg %p313
        $region30: #{tpu_custom_call.1} parent=27 // pred_check_branch
          %316 = sbr.rel (%p314) target = $region32
        $region31: #{tpu_custom_call.1} parent=27 // pred_region
          %317 = vst [vmem:[%s260] sm:$0xff] 0.0
          %318 = vst [vmem:[%s260 + $0x8] sm:$0xff] 0.0
          %319 = vst [vmem:[%s260 + $0x10] sm:$0xff] 0.0
          %320 = vst [vmem:[%s260 + $0x18] sm:$0xff] 0.0
          %321 = vst [vmem:[%s260 + $0x20] sm:$0xff] 0.0
          %322 = vst [vmem:[%s260 + $0x28] sm:$0xff] 0.0
          %323 = vst [vmem:[%s260 + $0x30] sm:$0xff] 0.0
          %324 = vst [vmem:[%s260 + $0x38] sm:$0xff] 0.0
          %325 = vst [vmem:[%s260 + $0x40] sm:$0xff] 0.0
          %326 = vst [vmem:[%s260 + $0x48] sm:$0xff] 0.0
          %327 = vst [vmem:[%s260 + $0x50] sm:$0xff] 0.0
          %328 = vst [vmem:[%s260 + $0x58] sm:$0xff] 0.0
          %329 = vst [vmem:[%s260 + $0x60] sm:$0xff] 0.0
          %330 = vst [vmem:[%s260 + $0x68] sm:$0xff] 0.0
          %331 = vst [vmem:[%s260 + $0x70] sm:$0xff] 0.0
          %332 = vst [vmem:[%s260 + $0x78] sm:$0xff] 0.0
          %333 = vst [vmem:[%s267] sm:$0xff] 0.0
          %334 = vst [vmem:[%s267 + $0x8] sm:$0xff] 0.0
          %335 = vst [vmem:[%s267 + $0x10] sm:$0xff] 0.0
          %336 = vst [vmem:[%s267 + $0x18] sm:$0xff] 0.0
          %337 = vst [vmem:[%s267 + $0x20] sm:$0xff] 0.0
          %338 = vst [vmem:[%s267 + $0x28] sm:$0xff] 0.0
          %339 = vst [vmem:[%s267 + $0x30] sm:$0xff] 0.0
          %340 = vst [vmem:[%s267 + $0x38] sm:$0xff] 0.0
          %341 = vst [vmem:[%s267 + $0x40] sm:$0xff] 0.0
          %342 = vst [vmem:[%s267 + $0x48] sm:$0xff] 0.0
          %343 = vst [vmem:[%s267 + $0x50] sm:$0xff] 0.0
          %344 = vst [vmem:[%s267 + $0x58] sm:$0xff] 0.0
          %345 = vst [vmem:[%s267 + $0x60] sm:$0xff] 0.0
          %346 = vst [vmem:[%s267 + $0x68] sm:$0xff] 0.0
          %347 = vst [vmem:[%s267 + $0x70] sm:$0xff] 0.0
          %348 = vst [vmem:[%s267 + $0x78] sm:$0xff] 0.0
          %349 = vst [vmem:[#allocation2] sm:$0xf] 0
          %350 = vst [vmem:[#allocation2 + $0x4] sm:$0xf] 0
          %351 = vst [vmem:[#allocation2 + $0x8] sm:$0xf] 0
          %352 = vst [vmem:[#allocation2 + $0xc] sm:$0xf] 0
          %353 = vst [vmem:[#allocation2 + $0x10] sm:$0xf] 0
          %354 = vst [vmem:[#allocation2 + $0x14] sm:$0xf] 0
          %355 = vst [vmem:[#allocation2 + $0x18] sm:$0xf] 0
          %356 = vst [vmem:[#allocation2 + $0x1c] sm:$0xf] 0
          %357 = vst [vmem:[#allocation2 + $0x20] sm:$0xf] 0
          %358 = vst [vmem:[#allocation2 + $0x24] sm:$0xf] 0
          %359 = vst [vmem:[#allocation2 + $0x28] sm:$0xf] 0
          %360 = vst [vmem:[#allocation2 + $0x2c] sm:$0xf] 0
          %361 = vst [vmem:[#allocation2 + $0x30] sm:$0xf] 0
          %362 = vst [vmem:[#allocation2 + $0x34] sm:$0xf] 0
          %363 = vst [vmem:[#allocation2 + $0x38] sm:$0xf] 0
          %364 = vst [vmem:[#allocation2 + $0x3c] sm:$0xf] 0
          %365 = vst [vmem:[#allocation3] sm:$0xf] 0
          %366 = vst [vmem:[#allocation3 + $0x4] sm:$0xf] 0
          %367 = vst [vmem:[#allocation3 + $0x8] sm:$0xf] 0
          %368 = vst [vmem:[#allocation3 + $0xc] sm:$0xf] 0
          %369 = vst [vmem:[#allocation3 + $0x10] sm:$0xf] 0
          %370 = vst [vmem:[#allocation3 + $0x14] sm:$0xf] 0
          %371 = vst [vmem:[#allocation3 + $0x18] sm:$0xf] 0
          %372 = vst [vmem:[#allocation3 + $0x1c] sm:$0xf] 0
          %373 = vst [vmem:[#allocation3 + $0x20] sm:$0xf] 0
          %374 = vst [vmem:[#allocation3 + $0x24] sm:$0xf] 0
          %375 = vst [vmem:[#allocation3 + $0x28] sm:$0xf] 0
          %376 = vst [vmem:[#allocation3 + $0x2c] sm:$0xf] 0
          %377 = vst [vmem:[#allocation3 + $0x30] sm:$0xf] 0
          %378 = vst [vmem:[#allocation3 + $0x34] sm:$0xf] 0
          %379 = vst [vmem:[#allocation3 + $0x38] sm:$0xf] 0
          %380 = vst [vmem:[#allocation3 + $0x3c] sm:$0xf] 0
        $region32: #{tpu_custom_call.1} parent=27 // pred_fallthru
          _
        %v381 = vld [vmem:[%s280] sm:$0xff]
        %v382 = vld [vmem:[%s280 + $0x8] sm:$0xff]
        %v383 = vld [vmem:[%s280 + $0x10] sm:$0xff]
        %v384 = vld [vmem:[%s280 + $0x18] sm:$0xff]
        %v385 = vld [vmem:[%s280 + $0x20] sm:$0xff]
        %v386 = vld [vmem:[%s280 + $0x28] sm:$0xff]
        %v387 = vld [vmem:[%s280 + $0x30] sm:$0xff]
        %v388 = vld [vmem:[%s280 + $0x38] sm:$0xff]
        %v389 = vld [vmem:[%s280 + $0x40] sm:$0xff]
        %v390 = vld [vmem:[%s280 + $0x48] sm:$0xff]
        %v391 = vld [vmem:[%s280 + $0x50] sm:$0xff]
        %v392 = vld [vmem:[%s280 + $0x58] sm:$0xff]
        %v393 = vld [vmem:[%s280 + $0x60] sm:$0xff]
        %v394 = vld [vmem:[%s280 + $0x68] sm:$0xff]
        %v395 = vld [vmem:[%s280 + $0x70] sm:$0xff]
        %v396 = vld [vmem:[%s280 + $0x78] sm:$0xff]
        %v397 = vld [vmem:[%s302] sm:$0xff]
        %v398 = vld [vmem:[%s302 + $0x8] sm:$0xff]
        %v399 = vld [vmem:[%s302 + $0x10] sm:$0xff]
        %v400 = vld [vmem:[%s302 + $0x18] sm:$0xff]
        %v401 = vld [vmem:[%s302 + $0x20] sm:$0xff]
        %v402 = vld [vmem:[%s302 + $0x28] sm:$0xff]
        %v403 = vld [vmem:[%s302 + $0x30] sm:$0xff]
        %v404 = vld [vmem:[%s302 + $0x38] sm:$0xff]
        %v405 = vld [vmem:[%s302 + $0x40] sm:$0xff]
        %v406 = vld [vmem:[%s302 + $0x48] sm:$0xff]
        %v407 = vld [vmem:[%s302 + $0x50] sm:$0xff]
        %v408 = vld [vmem:[%s302 + $0x58] sm:$0xff]
        %v409 = vld [vmem:[%s302 + $0x60] sm:$0xff]
        %v410 = vld [vmem:[%s302 + $0x68] sm:$0xff]
        %v411 = vld [vmem:[%s302 + $0x70] sm:$0xff]
        %v412 = vld [vmem:[%s302 + $0x78] sm:$0xff]
        %s413 = smul.u32 %s25, 2
        %s414 = sadd.s32 %s413, %s26
        %s415 = smul.u32 %s414, 128
        %v416 = vlaneseq
        %v417 = vshrl.u32 %v416, 7
        %v418 = vadd.s32 %v417, 8
        %v419 = vadd.s32 %v417, 16
        %v420 = vadd.s32 %v417, 24
        %v421 = vadd.s32 %v417, 32
        %v422 = vadd.s32 %v417, 40
        %v423 = vadd.s32 %v417, 48
        %v424 = vadd.s32 %v417, 56
        %v425 = vadd.s32 %v417, 64
        %v426 = vadd.s32 %v417, 72
        %v427 = vadd.s32 %v417, 80
        %v428 = vadd.s32 %v417, 88
        %v429 = vadd.s32 %v417, 96
        %v430 = vadd.s32 %v417, 104
        %v431 = vadd.s32 %v417, 112
        %v432 = vadd.s32 %v417, 120
        %v433 = vstv %s415
        %v434 = vadd.s32 %v433, %v417
        %v435 = vadd.s32 %v433, %v418
        %v436 = vadd.s32 %v433, %v419
        %v437 = vadd.s32 %v433, %v420
        %v438 = vadd.s32 %v433, %v421
        %v439 = vadd.s32 %v433, %v422
        %v440 = vadd.s32 %v433, %v423
        %v441 = vadd.s32 %v433, %v424
        %v442 = vadd.s32 %v433, %v425
        %v443 = vadd.s32 %v433, %v426
        %v444 = vadd.s32 %v433, %v427
        %v445 = vadd.s32 %v433, %v428
        %v446 = vadd.s32 %v433, %v429
        %v447 = vadd.s32 %v433, %v430
        %v448 = vadd.s32 %v433, %v431
        %v449 = vadd.s32 %v433, %v432
        %vm450 = vcmp.lt.s32.totalorder %v434, 500
        %vm451 = vcmp.lt.s32.totalorder %v435, 500
        %vm452 = vcmp.lt.s32.totalorder %v436, 500
        %vm453 = vcmp.lt.s32.totalorder %v437, 500
        %vm454 = vcmp.lt.s32.totalorder %v438, 500
        %vm455 = vcmp.lt.s32.totalorder %v439, 500
        %vm456 = vcmp.lt.s32.totalorder %v440, 500
        %vm457 = vcmp.lt.s32.totalorder %v441, 500
        %vm458 = vcmp.lt.s32.totalorder %v442, 500
        %vm459 = vcmp.lt.s32.totalorder %v443, 500
        %vm460 = vcmp.lt.s32.totalorder %v444, 500
        %vm461 = vcmp.lt.s32.totalorder %v445, 500
        %vm462 = vcmp.lt.s32.totalorder %v446, 500
        %vm463 = vcmp.lt.s32.totalorder %v447, 500
        %vm464 = vcmp.lt.s32.totalorder %v448, 500
        %vm465 = vcmp.lt.s32.totalorder %v449, 500
        %v466 = vsel %vm450, %v381, 0.0
        %v467 = vsel %vm451, %v382, 0.0
        %v468 = vsel %vm452, %v383, 0.0
        %v469 = vsel %vm453, %v384, 0.0
        %v470 = vsel %vm454, %v385, 0.0
        %v471 = vsel %vm455, %v386, 0.0
        %v472 = vsel %vm456, %v387, 0.0
        %v473 = vsel %vm457, %v388, 0.0
        %v474 = vsel %vm458, %v389, 0.0
        %v475 = vsel %vm459, %v390, 0.0
        %v476 = vsel %vm460, %v391, 0.0
        %v477 = vsel %vm461, %v392, 0.0
        %v478 = vsel %vm462, %v393, 0.0
        %v479 = vsel %vm463, %v394, 0.0
        %v480 = vsel %vm464, %v395, 0.0
        %v481 = vsel %vm465, %v396, 0.0
        %v482 = vsel %vm450, %v397, 0.0
        %v483 = vsel %vm451, %v398, 0.0
        %v484 = vsel %vm452, %v399, 0.0
        %v485 = vsel %vm453, %v400, 0.0
        %v486 = vsel %vm454, %v401, 0.0
        %v487 = vsel %vm455, %v402, 0.0
        %v488 = vsel %vm456, %v403, 0.0
        %v489 = vsel %vm457, %v404, 0.0
        %v490 = vsel %vm458, %v405, 0.0
        %v491 = vsel %vm459, %v406, 0.0
        %v492 = vsel %vm460, %v407, 0.0
        %v493 = vsel %vm461, %v408, 0.0
        %v494 = vsel %vm462, %v409, 0.0
        %v495 = vsel %vm463, %v410, 0.0
        %v496 = vsel %vm464, %v411, 0.0
        %v497 = vsel %vm465, %v412, 0.0
        %v498 = vpack.c.bf16 %v467, %v466
        %v499 = vpack.c.bf16 %v469, %v468
        %v500 = vpack.c.bf16 %v471, %v470
        %v501 = vpack.c.bf16 %v473, %v472
        %v502 = vpack.c.bf16 %v475, %v474
        %v503 = vpack.c.bf16 %v477, %v476
        %v504 = vpack.c.bf16 %v479, %v478
        %v505 = vpack.c.bf16 %v481, %v480
        %v506 = vunpack.c.l.bf16 %v498
        %v507 = vunpack.c.h.bf16 %v498
        %v508 = vunpack.c.l.bf16 %v499
        %v509 = vunpack.c.h.bf16 %v499
        %v510 = vunpack.c.l.bf16 %v500
        %v511 = vunpack.c.h.bf16 %v500
        %v512 = vunpack.c.l.bf16 %v501
        %v513 = vunpack.c.h.bf16 %v501
        %v514 = vunpack.c.l.bf16 %v502
        %v515 = vunpack.c.h.bf16 %v502
        %v516 = vunpack.c.l.bf16 %v503
        %v517 = vunpack.c.h.bf16 %v503
        %v518 = vunpack.c.l.bf16 %v504
        %v519 = vunpack.c.h.bf16 %v504
        %v520 = vunpack.c.l.bf16 %v505
        %v521 = vunpack.c.h.bf16 %v505
        %v522 = vsub.f32 %v466, %v506
        %v523 = vsub.f32 %v467, %v507
        %v524 = vsub.f32 %v468, %v508
        %v525 = vsub.f32 %v469, %v509
        %v526 = vsub.f32 %v470, %v510
        %v527 = vsub.f32 %v471, %v511
        %v528 = vsub.f32 %v472, %v512
        %v529 = vsub.f32 %v473, %v513
        %v530 = vsub.f32 %v474, %v514
        %v531 = vsub.f32 %v475, %v515
        %v532 = vsub.f32 %v476, %v516
        %v533 = vsub.f32 %v477, %v517
        %v534 = vsub.f32 %v478, %v518
        %v535 = vsub.f32 %v479, %v519
        %v536 = vsub.f32 %v480, %v520
        %v537 = vsub.f32 %v481, %v521
        %v538 = vpack.c.bf16 %v523, %v522
        %v539 = vpack.c.bf16 %v525, %v524
        %v540 = vpack.c.bf16 %v527, %v526
        %v541 = vpack.c.bf16 %v529, %v528
        %v542 = vpack.c.bf16 %v531, %v530
        %v543 = vpack.c.bf16 %v533, %v532
        %v544 = vpack.c.bf16 %v535, %v534
        %v545 = vpack.c.bf16 %v537, %v536
        %v546 = vpack.c.bf16 %v483, %v482
        %v547 = vpack.c.bf16 %v485, %v484
        %v548 = vpack.c.bf16 %v487, %v486
        %v549 = vpack.c.bf16 %v489, %v488
        %v550 = vpack.c.bf16 %v491, %v490
        %v551 = vpack.c.bf16 %v493, %v492
        %v552 = vpack.c.bf16 %v495, %v494
        %v553 = vpack.c.bf16 %v497, %v496
        %v554 = vunpack.c.l.bf16 %v546
        %v555 = vunpack.c.h.bf16 %v546
        %v556 = vunpack.c.l.bf16 %v547
        %v557 = vunpack.c.h.bf16 %v547
        %v558 = vunpack.c.l.bf16 %v548
        %v559 = vunpack.c.h.bf16 %v548
        %v560 = vunpack.c.l.bf16 %v549
        %v561 = vunpack.c.h.bf16 %v549
        %v562 = vunpack.c.l.bf16 %v550
        %v563 = vunpack.c.h.bf16 %v550
        %v564 = vunpack.c.l.bf16 %v551
        %v565 = vunpack.c.h.bf16 %v551
        %v566 = vunpack.c.l.bf16 %v552
        %v567 = vunpack.c.h.bf16 %v552
        %v568 = vunpack.c.l.bf16 %v553
        %v569 = vunpack.c.h.bf16 %v553
        %v570 = vsub.f32 %v482, %v554
        %v571 = vsub.f32 %v483, %v555
        %v572 = vsub.f32 %v484, %v556
        %v573 = vsub.f32 %v485, %v557
        %v574 = vsub.f32 %v486, %v558
        %v575 = vsub.f32 %v487, %v559
        %v576 = vsub.f32 %v488, %v560
        %v577 = vsub.f32 %v489, %v561
        %v578 = vsub.f32 %v490, %v562
        %v579 = vsub.f32 %v491, %v563
        %v580 = vsub.f32 %v492, %v564
        %v581 = vsub.f32 %v493, %v565
        %v582 = vsub.f32 %v494, %v566
        %v583 = vsub.f32 %v495, %v567
        %v584 = vsub.f32 %v496, %v568
        %v585 = vsub.f32 %v497, %v569
        %v586 = vpack.c.bf16 %v571, %v570
        %v587 = vpack.c.bf16 %v573, %v572
        %v588 = vpack.c.bf16 %v575, %v574
        %v589 = vpack.c.bf16 %v577, %v576
        %v590 = vpack.c.bf16 %v579, %v578
        %v591 = vpack.c.bf16 %v581, %v580
        %v592 = vpack.c.bf16 %v583, %v582
        %v593 = vpack.c.bf16 %v585, %v584
        %v602 = vunpack.c.l.b16 %v498
        %v603 = vunpack.c.h.b16 %v498
        %v604 = vunpack.c.l.b16 %v499
        %v605 = vunpack.c.h.b16 %v499
        %v606 = vunpack.c.l.b16 %v500
        %v607 = vunpack.c.h.b16 %v500
        %v608 = vunpack.c.l.b16 %v501
        %v609 = vunpack.c.h.b16 %v501
        %v610 = vunpack.c.l.b16 %v502
        %v611 = vunpack.c.h.b16 %v502
        %v612 = vunpack.c.l.b16 %v503
        %v613 = vunpack.c.h.b16 %v503
        %v614 = vunpack.c.l.b16 %v504
        %v615 = vunpack.c.h.b16 %v504
        %v616 = vunpack.c.l.b16 %v505
        %v617 = vunpack.c.h.b16 %v505
        %v618 = vpack.c.b16 %v602, %v602
        %v619 = vpack.c.b16 %v603, %v603
        %v620 = vpack.c.b16 %v604, %v604
        %v621 = vpack.c.b16 %v605, %v605
        %v622 = vpack.c.b16 %v606, %v606
        %v623 = vpack.c.b16 %v607, %v607
        %v624 = vpack.c.b16 %v608, %v608
        %v625 = vpack.c.b16 %v609, %v609
        %v626 = vpack.c.b16 %v610, %v610
        %v627 = vpack.c.b16 %v611, %v611
        %v628 = vpack.c.b16 %v612, %v612
        %v629 = vpack.c.b16 %v613, %v613
        %v630 = vpack.c.b16 %v614, %v614
        %v631 = vpack.c.b16 %v615, %v615
        %v632 = vpack.c.b16 %v616, %v616
        %v633 = vpack.c.b16 %v617, %v617
        %vm650 = vcmask 125952
        %651 = vst.msk [vmem:[#allocation2] sm:$0xf] %vm650, %v618
        %652 = vst.msk [vmem:[#allocation2 + $0x4] sm:$0xf] %vm650, %v619
        %653 = vst.msk [vmem:[#allocation2 + $0x8] sm:$0xf] %vm650, %v620
        %654 = vst.msk [vmem:[#allocation2 + $0xc] sm:$0xf] %vm650, %v621
        %655 = vst.msk [vmem:[#allocation2 + $0x10] sm:$0xf] %vm650, %v622
        %656 = vst.msk [vmem:[#allocation2 + $0x14] sm:$0xf] %vm650, %v623
        %657 = vst.msk [vmem:[#allocation2 + $0x18] sm:$0xf] %vm650, %v624
        %658 = vst.msk [vmem:[#allocation2 + $0x1c] sm:$0xf] %vm650, %v625
        %659 = vst.msk [vmem:[#allocation2 + $0x20] sm:$0xf] %vm650, %v626
        %660 = vst.msk [vmem:[#allocation2 + $0x24] sm:$0xf] %vm650, %v627
        %661 = vst.msk [vmem:[#allocation2 + $0x28] sm:$0xf] %vm650, %v628
        %662 = vst.msk [vmem:[#allocation2 + $0x2c] sm:$0xf] %vm650, %v629
        %663 = vst.msk [vmem:[#allocation2 + $0x30] sm:$0xf] %vm650, %v630
        %664 = vst.msk [vmem:[#allocation2 + $0x34] sm:$0xf] %vm650, %v631
        %665 = vst.msk [vmem:[#allocation2 + $0x38] sm:$0xf] %vm650, %v632
        %666 = vst.msk [vmem:[#allocation2 + $0x3c] sm:$0xf] %vm650, %v633
        %v675 = vunpack.c.l.b16 %v546
        %v676 = vunpack.c.h.b16 %v546
        %v677 = vunpack.c.l.b16 %v547
        %v678 = vunpack.c.h.b16 %v547
        %v679 = vunpack.c.l.b16 %v548
        %v680 = vunpack.c.h.b16 %v548
        %v681 = vunpack.c.l.b16 %v549
        %v682 = vunpack.c.h.b16 %v549
        %v683 = vunpack.c.l.b16 %v550
        %v684 = vunpack.c.h.b16 %v550
        %v685 = vunpack.c.l.b16 %v551
        %v686 = vunpack.c.h.b16 %v551
        %v687 = vunpack.c.l.b16 %v552
        %v688 = vunpack.c.h.b16 %v552
        %v689 = vunpack.c.l.b16 %v553
        %v690 = vunpack.c.h.b16 %v553
        %v691 = vpack.c.b16 %v675, %v675
        %v692 = vpack.c.b16 %v676, %v676
        %v693 = vpack.c.b16 %v677, %v677
        %v694 = vpack.c.b16 %v678, %v678
        %v695 = vpack.c.b16 %v679, %v679
        %v696 = vpack.c.b16 %v680, %v680
        %v697 = vpack.c.b16 %v681, %v681
        %v698 = vpack.c.b16 %v682, %v682
        %v699 = vpack.c.b16 %v683, %v683
        %v700 = vpack.c.b16 %v684, %v684
        %v701 = vpack.c.b16 %v685, %v685
        %v702 = vpack.c.b16 %v686, %v686
        %v703 = vpack.c.b16 %v687, %v687
        %v704 = vpack.c.b16 %v688, %v688
        %v705 = vpack.c.b16 %v689, %v689
        %v706 = vpack.c.b16 %v690, %v690
        %707 = vrot.lane.b32.xlu0 %v691, 16
        %v708 = vpop.permute.xlu0 %707
        %709 = vrot.lane.b32.xlu0 %v692, 16
        %v710 = vpop.permute.xlu0 %709
        %711 = vrot.lane.b32.xlu0 %v693, 16
        %v712 = vpop.permute.xlu0 %711
        %713 = vrot.lane.b32.xlu0 %v694, 16
        %v714 = vpop.permute.xlu0 %713
        %715 = vrot.lane.b32.xlu0 %v695, 16
        %v716 = vpop.permute.xlu0 %715
        %717 = vrot.lane.b32.xlu0 %v696, 16
        %v718 = vpop.permute.xlu0 %717
        %719 = vrot.lane.b32.xlu0 %v697, 16
        %v720 = vpop.permute.xlu0 %719
        %721 = vrot.lane.b32.xlu0 %v698, 16
        %v722 = vpop.permute.xlu0 %721
        %723 = vrot.lane.b32.xlu0 %v699, 16
        %v724 = vpop.permute.xlu0 %723
        %725 = vrot.lane.b32.xlu0 %v700, 16
        %v726 = vpop.permute.xlu0 %725
        %727 = vrot.lane.b32.xlu0 %v701, 16
        %v728 = vpop.permute.xlu0 %727
        %729 = vrot.lane.b32.xlu0 %v702, 16
        %v730 = vpop.permute.xlu0 %729
        %731 = vrot.lane.b32.xlu0 %v703, 16
        %v732 = vpop.permute.xlu0 %731
        %733 = vrot.lane.b32.xlu0 %v704, 16
        %v734 = vpop.permute.xlu0 %733
        %735 = vrot.lane.b32.xlu0 %v705, 16
        %v736 = vpop.permute.xlu0 %735
        %737 = vrot.lane.b32.xlu0 %v706, 16
        %v738 = vpop.permute.xlu0 %737
        %vm755 = vcmask 134272
        %756 = vst.msk [vmem:[#allocation2] sm:$0xf] %vm755, %v708
        %757 = vst.msk [vmem:[#allocation2 + $0x4] sm:$0xf] %vm755, %v710
        %758 = vst.msk [vmem:[#allocation2 + $0x8] sm:$0xf] %vm755, %v712
        %759 = vst.msk [vmem:[#allocation2 + $0xc] sm:$0xf] %vm755, %v714
        %760 = vst.msk [vmem:[#allocation2 + $0x10] sm:$0xf] %vm755, %v716
        %761 = vst.msk [vmem:[#allocation2 + $0x14] sm:$0xf] %vm755, %v718
        %762 = vst.msk [vmem:[#allocation2 + $0x18] sm:$0xf] %vm755, %v720
        %763 = vst.msk [vmem:[#allocation2 + $0x1c] sm:$0xf] %vm755, %v722
        %764 = vst.msk [vmem:[#allocation2 + $0x20] sm:$0xf] %vm755, %v724
        %765 = vst.msk [vmem:[#allocation2 + $0x24] sm:$0xf] %vm755, %v726
        %766 = vst.msk [vmem:[#allocation2 + $0x28] sm:$0xf] %vm755, %v728
        %767 = vst.msk [vmem:[#allocation2 + $0x2c] sm:$0xf] %vm755, %v730
        %768 = vst.msk [vmem:[#allocation2 + $0x30] sm:$0xf] %vm755, %v732
        %769 = vst.msk [vmem:[#allocation2 + $0x34] sm:$0xf] %vm755, %v734
        %770 = vst.msk [vmem:[#allocation2 + $0x38] sm:$0xf] %vm755, %v736
        %771 = vst.msk [vmem:[#allocation2 + $0x3c] sm:$0xf] %vm755, %v738
        %v780 = vunpack.c.l.b16 %v538
        %v781 = vunpack.c.h.b16 %v538
        %v782 = vunpack.c.l.b16 %v539
        %v783 = vunpack.c.h.b16 %v539
        %v784 = vunpack.c.l.b16 %v540
        %v785 = vunpack.c.h.b16 %v540
        %v786 = vunpack.c.l.b16 %v541
        %v787 = vunpack.c.h.b16 %v541
        %v788 = vunpack.c.l.b16 %v542
        %v789 = vunpack.c.h.b16 %v542
        %v790 = vunpack.c.l.b16 %v543
        %v791 = vunpack.c.h.b16 %v543
        %v792 = vunpack.c.l.b16 %v544
        %v793 = vunpack.c.h.b16 %v544
        %v794 = vunpack.c.l.b16 %v545
        %v795 = vunpack.c.h.b16 %v545
        %v796 = vpack.c.b16 %v780, %v780
        %v797 = vpack.c.b16 %v781, %v781
        %v798 = vpack.c.b16 %v782, %v782
        %v799 = vpack.c.b16 %v783, %v783
        %v800 = vpack.c.b16 %v784, %v784
        %v801 = vpack.c.b16 %v785, %v785
        %v802 = vpack.c.b16 %v786, %v786
        %v803 = vpack.c.b16 %v787, %v787
        %v804 = vpack.c.b16 %v788, %v788
        %v805 = vpack.c.b16 %v789, %v789
        %v806 = vpack.c.b16 %v790, %v790
        %v807 = vpack.c.b16 %v791, %v791
        %v808 = vpack.c.b16 %v792, %v792
        %v809 = vpack.c.b16 %v793, %v793
        %v810 = vpack.c.b16 %v794, %v794
        %v811 = vpack.c.b16 %v795, %v795
        %828 = vst.msk [vmem:[#allocation3] sm:$0xf] %vm650, %v796
        %829 = vst.msk [vmem:[#allocation3 + $0x4] sm:$0xf] %vm650, %v797
        %830 = vst.msk [vmem:[#allocation3 + $0x8] sm:$0xf] %vm650, %v798
        %831 = vst.msk [vmem:[#allocation3 + $0xc] sm:$0xf] %vm650, %v799
        %832 = vst.msk [vmem:[#allocation3 + $0x10] sm:$0xf] %vm650, %v800
        %833 = vst.msk [vmem:[#allocation3 + $0x14] sm:$0xf] %vm650, %v801
        %834 = vst.msk [vmem:[#allocation3 + $0x18] sm:$0xf] %vm650, %v802
        %835 = vst.msk [vmem:[#allocation3 + $0x1c] sm:$0xf] %vm650, %v803
        %836 = vst.msk [vmem:[#allocation3 + $0x20] sm:$0xf] %vm650, %v804
        %837 = vst.msk [vmem:[#allocation3 + $0x24] sm:$0xf] %vm650, %v805
        %838 = vst.msk [vmem:[#allocation3 + $0x28] sm:$0xf] %vm650, %v806
        %839 = vst.msk [vmem:[#allocation3 + $0x2c] sm:$0xf] %vm650, %v807
        %840 = vst.msk [vmem:[#allocation3 + $0x30] sm:$0xf] %vm650, %v808
        %841 = vst.msk [vmem:[#allocation3 + $0x34] sm:$0xf] %vm650, %v809
        %842 = vst.msk [vmem:[#allocation3 + $0x38] sm:$0xf] %vm650, %v810
        %843 = vst.msk [vmem:[#allocation3 + $0x3c] sm:$0xf] %vm650, %v811
        %v852 = vunpack.c.l.b16 %v586
        %v853 = vunpack.c.h.b16 %v586
        %v854 = vunpack.c.l.b16 %v587
        %v855 = vunpack.c.h.b16 %v587
        %v856 = vunpack.c.l.b16 %v588
        %v857 = vunpack.c.h.b16 %v588
        %v858 = vunpack.c.l.b16 %v589
        %v859 = vunpack.c.h.b16 %v589
        %v860 = vunpack.c.l.b16 %v590
        %v861 = vunpack.c.h.b16 %v590
        %v862 = vunpack.c.l.b16 %v591
        %v863 = vunpack.c.h.b16 %v591
        %v864 = vunpack.c.l.b16 %v592
        %v865 = vunpack.c.h.b16 %v592
        %v866 = vunpack.c.l.b16 %v593
        %v867 = vunpack.c.h.b16 %v593
        %v868 = vpack.c.b16 %v852, %v852
        %v869 = vpack.c.b16 %v853, %v853
        %v870 = vpack.c.b16 %v854, %v854
        %v871 = vpack.c.b16 %v855, %v855
        %v872 = vpack.c.b16 %v856, %v856
        %v873 = vpack.c.b16 %v857, %v857
        %v874 = vpack.c.b16 %v858, %v858
        %v875 = vpack.c.b16 %v859, %v859
        %v876 = vpack.c.b16 %v860, %v860
        %v877 = vpack.c.b16 %v861, %v861
        %v878 = vpack.c.b16 %v862, %v862
        %v879 = vpack.c.b16 %v863, %v863
        %v880 = vpack.c.b16 %v864, %v864
        %v881 = vpack.c.b16 %v865, %v865
        %v882 = vpack.c.b16 %v866, %v866
        %v883 = vpack.c.b16 %v867, %v867
        %884 = vrot.lane.b32.xlu0 %v868, 16
        %v885 = vpop.permute.xlu0 %884
        %886 = vrot.lane.b32.xlu0 %v869, 16
        %v887 = vpop.permute.xlu0 %886
        %888 = vrot.lane.b32.xlu0 %v870, 16
        %v889 = vpop.permute.xlu0 %888
        %890 = vrot.lane.b32.xlu0 %v871, 16
        %v891 = vpop.permute.xlu0 %890
        %892 = vrot.lane.b32.xlu0 %v872, 16
        %v893 = vpop.permute.xlu0 %892
        %894 = vrot.lane.b32.xlu0 %v873, 16
        %v895 = vpop.permute.xlu0 %894
        %896 = vrot.lane.b32.xlu0 %v874, 16
        %v897 = vpop.permute.xlu0 %896
        %898 = vrot.lane.b32.xlu0 %v875, 16
        %v899 = vpop.permute.xlu0 %898
        %900 = vrot.lane.b32.xlu0 %v876, 16
        %v901 = vpop.permute.xlu0 %900
        %902 = vrot.lane.b32.xlu0 %v877, 16
        %v903 = vpop.permute.xlu0 %902
        %904 = vrot.lane.b32.xlu0 %v878, 16
        %v905 = vpop.permute.xlu0 %904
        %906 = vrot.lane.b32.xlu0 %v879, 16
        %v907 = vpop.permute.xlu0 %906
        %908 = vrot.lane.b32.xlu0 %v880, 16
        %v909 = vpop.permute.xlu0 %908
        %910 = vrot.lane.b32.xlu0 %v881, 16
        %v911 = vpop.permute.xlu0 %910
        %912 = vrot.lane.b32.xlu0 %v882, 16
        %v913 = vpop.permute.xlu0 %912
        %914 = vrot.lane.b32.xlu0 %v883, 16
        %v915 = vpop.permute.xlu0 %914
        %932 = vst.msk [vmem:[#allocation3] sm:$0xf] %vm755, %v885
        %933 = vst.msk [vmem:[#allocation3 + $0x4] sm:$0xf] %vm755, %v887
        %934 = vst.msk [vmem:[#allocation3 + $0x8] sm:$0xf] %vm755, %v889
        %935 = vst.msk [vmem:[#allocation3 + $0xc] sm:$0xf] %vm755, %v891
        %936 = vst.msk [vmem:[#allocation3 + $0x10] sm:$0xf] %vm755, %v893
        %937 = vst.msk [vmem:[#allocation3 + $0x14] sm:$0xf] %vm755, %v895
        %938 = vst.msk [vmem:[#allocation3 + $0x18] sm:$0xf] %vm755, %v897
        %939 = vst.msk [vmem:[#allocation3 + $0x1c] sm:$0xf] %vm755, %v899
        %940 = vst.msk [vmem:[#allocation3 + $0x20] sm:$0xf] %vm755, %v901
        %941 = vst.msk [vmem:[#allocation3 + $0x24] sm:$0xf] %vm755, %v903
        %942 = vst.msk [vmem:[#allocation3 + $0x28] sm:$0xf] %vm755, %v905
        %943 = vst.msk [vmem:[#allocation3 + $0x2c] sm:$0xf] %vm755, %v907
        %944 = vst.msk [vmem:[#allocation3 + $0x30] sm:$0xf] %vm755, %v909
        %945 = vst.msk [vmem:[#allocation3 + $0x34] sm:$0xf] %vm755, %v911
        %946 = vst.msk [vmem:[#allocation3 + $0x38] sm:$0xf] %vm755, %v913
        %947 = vst.msk [vmem:[#allocation3 + $0x3c] sm:$0xf] %vm755, %v915
        %v948 = vld [vmem:[#allocation2] sm:$0xf]
        %v949 = vld [vmem:[#allocation2 + $0x4] sm:$0xf]
        %v950 = vld [vmem:[#allocation2 + $0x8] sm:$0xf]
        %v951 = vld [vmem:[#allocation2 + $0xc] sm:$0xf]
        %v952 = vld [vmem:[#allocation2 + $0x10] sm:$0xf]
        %v953 = vld [vmem:[#allocation2 + $0x14] sm:$0xf]
        %v954 = vld [vmem:[#allocation2 + $0x18] sm:$0xf]
        %v955 = vld [vmem:[#allocation2 + $0x1c] sm:$0xf]
        %v956 = vld [vmem:[#allocation2 + $0x20] sm:$0xf]
        %v957 = vld [vmem:[#allocation2 + $0x24] sm:$0xf]
        %v958 = vld [vmem:[#allocation2 + $0x28] sm:$0xf]
        %v959 = vld [vmem:[#allocation2 + $0x2c] sm:$0xf]
        %v960 = vld [vmem:[#allocation2 + $0x30] sm:$0xf]
        %v961 = vld [vmem:[#allocation2 + $0x34] sm:$0xf]
        %v962 = vld [vmem:[#allocation2 + $0x38] sm:$0xf]
        %v963 = vld [vmem:[#allocation2 + $0x3c] sm:$0xf]
        %v964 = vld [vmem:[#allocation3] sm:$0xf]
        %v965 = vld [vmem:[#allocation3 + $0x4] sm:$0xf]
        %v966 = vld [vmem:[#allocation3 + $0x8] sm:$0xf]
        %v967 = vld [vmem:[#allocation3 + $0xc] sm:$0xf]
        %v968 = vld [vmem:[#allocation3 + $0x10] sm:$0xf]
        %v969 = vld [vmem:[#allocation3 + $0x14] sm:$0xf]
        %v970 = vld [vmem:[#allocation3 + $0x18] sm:$0xf]
        %v971 = vld [vmem:[#allocation3 + $0x1c] sm:$0xf]
        %v972 = vld [vmem:[#allocation3 + $0x20] sm:$0xf]
        %v973 = vld [vmem:[#allocation3 + $0x24] sm:$0xf]
        %v974 = vld [vmem:[#allocation3 + $0x28] sm:$0xf]
        %v975 = vld [vmem:[#allocation3 + $0x2c] sm:$0xf]
        %v976 = vld [vmem:[#allocation3 + $0x30] sm:$0xf]
        %v977 = vld [vmem:[#allocation3 + $0x34] sm:$0xf]
        %v978 = vld [vmem:[#allocation3 + $0x38] sm:$0xf]
        %v979 = vld [vmem:[#allocation3 + $0x3c] sm:$0xf]
        %v980 = vld [vmem:[%s260] sm:$0xff]
        %v981 = vld [vmem:[%s260 + $0x8] sm:$0xff]
        %v982 = vld [vmem:[%s260 + $0x10] sm:$0xff]
        %v983 = vld [vmem:[%s260 + $0x18] sm:$0xff]
        %v984 = vld [vmem:[%s260 + $0x20] sm:$0xff]
        %v985 = vld [vmem:[%s260 + $0x28] sm:$0xff]
        %v986 = vld [vmem:[%s260 + $0x30] sm:$0xff]
        %v987 = vld [vmem:[%s260 + $0x38] sm:$0xff]
        %v988 = vld [vmem:[%s260 + $0x40] sm:$0xff]
        %v989 = vld [vmem:[%s260 + $0x48] sm:$0xff]
        %v990 = vld [vmem:[%s260 + $0x50] sm:$0xff]
        %v991 = vld [vmem:[%s260 + $0x58] sm:$0xff]
        %v992 = vld [vmem:[%s260 + $0x60] sm:$0xff]
        %v993 = vld [vmem:[%s260 + $0x68] sm:$0xff]
        %v994 = vld [vmem:[%s260 + $0x70] sm:$0xff]
        %v995 = vld [vmem:[%s260 + $0x78] sm:$0xff]
        %v1012 = vunpack.c.l.b16 %v948
        %v1013 = vunpack.c.l.b16 %v949
        %v1014 = vunpack.c.l.b16 %v950
        %v1015 = vunpack.c.l.b16 %v951
        %v1016 = vunpack.c.l.b16 %v952
        %v1017 = vunpack.c.l.b16 %v953
        %v1018 = vunpack.c.l.b16 %v954
        %v1019 = vunpack.c.l.b16 %v955
        %v1020 = vunpack.c.l.b16 %v956
        %v1021 = vunpack.c.l.b16 %v957
        %v1022 = vunpack.c.l.b16 %v958
        %v1023 = vunpack.c.l.b16 %v959
        %v1024 = vunpack.c.l.b16 %v960
        %v1025 = vunpack.c.l.b16 %v961
        %v1026 = vunpack.c.l.b16 %v962
        %v1027 = vunpack.c.l.b16 %v963
        %v1028 = vpack.c.b16 %v1013, %v1012
        %v1029 = vpack.c.b16 %v1015, %v1014
        %v1030 = vpack.c.b16 %v1017, %v1016
        %v1031 = vpack.c.b16 %v1019, %v1018
        %v1032 = vpack.c.b16 %v1021, %v1020
        %v1033 = vpack.c.b16 %v1023, %v1022
        %v1034 = vpack.c.b16 %v1025, %v1024
        %v1035 = vpack.c.b16 %v1027, %v1026
        %1044 = vxpose.xlu0.c.b16.start [1/8] %v1028, 128
        %1045 = vxpose.xlu0.c.b16.cont [2/8] %v1029, 128
        %1046 = vxpose.xlu0.c.b16.cont [3/8] %v1030, 128
        %1047 = vxpose.xlu0.c.b16.cont [4/8] %v1031, 128
        %1048 = vxpose.xlu0.c.b16.cont [5/8] %v1032, 128
        %1049 = vxpose.xlu0.c.b16.cont [6/8] %v1033, 128
        %1050 = vxpose.xlu0.c.b16.cont [7/8] %v1034, 128
        %1051 = vxpose.xlu0.c.b16.end [8/8] %v1035, 128
        %v1052 = vpop.trf.xlu0
        %v1053 = vpop.trf.xlu0
        %v1054 = vpop.trf.xlu0
        %v1055 = vpop.trf.xlu0
        %v1056 = vpop.trf.xlu0
        %v1057 = vpop.trf.xlu0
        %v1058 = vpop.trf.xlu0
        %v1059 = vpop.trf.xlu0
        %1060 = vmatprep.subr.bf16.mxu0 0
        %1061 = vmatpush1.bf16.msra.mxu0 %v1035
        %1062 = vmatprep.subr.bf16.mxu0 0
        %1063 = vmatpush1.bf16.msra.mxu0 %v1034
        %1064 = vmatprep.subr.bf16.mxu0 0
        %1065 = vmatpush1.bf16.msra.mxu0 %v1033
        %1066 = vmatprep.subr.bf16.mxu0 0
        %1067 = vmatpush1.bf16.msra.mxu0 %v1032
        %1068 = vmatprep.subr.bf16.mxu0 0
        %1069 = vmatpush1.bf16.msra.mxu0 %v1031
        %1070 = vmatprep.subr.bf16.mxu0 0
        %1071 = vmatpush1.bf16.msra.mxu0 %v1030
        %1072 = vmatprep.subr.bf16.mxu0 0
        %1073 = vmatpush1.bf16.msra.mxu0 %v1029
        %1074 = vmatprep.subr.bf16.mxu0 0
        %1075 = vmatpush1.bf16.msra.mxu0 %v1028
        %1076 = vmatprep.subr.bf16.mxu0 0
        %1077 = vmatpush2.bf16.msra.mxu0 0
        %1078 = vmatprep.subr.bf16.mxu0 0
        %1079 = vmatpush2.bf16.msra.mxu0 0
        %1080 = vmatprep.subr.bf16.mxu0 0
        %1081 = vmatpush2.bf16.msra.mxu0 0
        %1082 = vmatprep.subr.bf16.mxu0 0
        %1083 = vmatpush2.bf16.msra.mxu0 0
        %1084 = vmatprep.subr.bf16.mxu0 0
        %1085 = vmatpush2.bf16.msra.mxu0 0
        %1086 = vmatprep.subr.bf16.mxu0 0
        %1087 = vmatpush2.bf16.msra.mxu0 0
        %1088 = vmatprep.subr.bf16.mxu0 0
        %1089 = vmatpush2.bf16.msra.mxu0 0
        %1090 = vmatprep.subr.bf16.mxu0 0
        %1091 = vmatpush2.bf16.msra.mxu0 0
        %1092 = vmatprep.mubr.bf16.mxu0 0
        %1093 = vmatmul.mubr.bf16.gmra.mxu0 %v1052
        %v1094 = vpop.f32.mrf.mxu0
        %v1095 = vadd.f32 0.0, %v1094
        %v1096 = vpop.f32.mrf.mxu0
        %v1097 = vpop.f32.mrf.mxu0
        %v1098 = vadd.f32 0.0, %v1097
        %v1099 = vpop.f32.mrf.mxu0
        %1100 = vmatprep.mubr.bf16.mxu0 0
        %1101 = vmatmul.mubr.bf16.gmra.mxu0 %v1053
        %v1102 = vpop.f32.mrf.mxu0
        %v1103 = vadd.f32 0.0, %v1102
        %v1104 = vpop.f32.mrf.mxu0
        %v1105 = vpop.f32.mrf.mxu0
        %v1106 = vadd.f32 0.0, %v1105
        %v1107 = vpop.f32.mrf.mxu0
        %1108 = vmatprep.mubr.bf16.mxu0 0
        %1109 = vmatmul.mubr.bf16.gmra.mxu0 %v1054
        %v1110 = vpop.f32.mrf.mxu0
        %v1111 = vadd.f32 0.0, %v1110
        %v1112 = vpop.f32.mrf.mxu0
        %v1113 = vpop.f32.mrf.mxu0
        %v1114 = vadd.f32 0.0, %v1113
        %v1115 = vpop.f32.mrf.mxu0
        %1116 = vmatprep.mubr.bf16.mxu0 0
        %1117 = vmatmul.mubr.bf16.gmra.mxu0 %v1055
        %v1118 = vpop.f32.mrf.mxu0
        %v1119 = vadd.f32 0.0, %v1118
        %v1120 = vpop.f32.mrf.mxu0
        %v1121 = vpop.f32.mrf.mxu0
        %v1122 = vadd.f32 0.0, %v1121
        %v1123 = vpop.f32.mrf.mxu0
        %1124 = vmatprep.mubr.bf16.mxu0 0
        %1125 = vmatmul.mubr.bf16.gmra.mxu0 %v1056
        %v1126 = vpop.f32.mrf.mxu0
        %v1127 = vadd.f32 0.0, %v1126
        %v1128 = vpop.f32.mrf.mxu0
        %v1129 = vpop.f32.mrf.mxu0
        %v1130 = vadd.f32 0.0, %v1129
        %v1131 = vpop.f32.mrf.mxu0
        %1132 = vmatprep.mubr.bf16.mxu0 0
        %1133 = vmatmul.mubr.bf16.gmra.mxu0 %v1057
        %v1134 = vpop.f32.mrf.mxu0
        %v1135 = vadd.f32 0.0, %v1134
        %v1136 = vpop.f32.mrf.mxu0
        %v1137 = vpop.f32.mrf.mxu0
        %v1138 = vadd.f32 0.0, %v1137
        %v1139 = vpop.f32.mrf.mxu0
        %1140 = vmatprep.mubr.bf16.mxu0 0
        %1141 = vmatmul.mubr.bf16.gmra.mxu0 %v1058
        %v1142 = vpop.f32.mrf.mxu0
        %v1143 = vadd.f32 0.0, %v1142
        %v1144 = vpop.f32.mrf.mxu0
        %v1145 = vpop.f32.mrf.mxu0
        %v1146 = vadd.f32 0.0, %v1145
        %v1147 = vpop.f32.mrf.mxu0
        %1148 = vmatprep.mubr.bf16.mxu0 0
        %1149 = vmatmul.mubr.bf16.gmra.mxu0 %v1059
        %v1150 = vpop.f32.mrf.mxu0
        %v1151 = vadd.f32 0.0, %v1150
        %v1152 = vpop.f32.mrf.mxu0
        %v1153 = vpop.f32.mrf.mxu0
        %v1154 = vadd.f32 0.0, %v1153
        %v1155 = vpop.f32.mrf.mxu0
        %1156 = vdwg.mxu0
        %v1157 = vadd.f32 %v980, %v1095
        %v1158 = vadd.f32 %v981, %v1098
        %v1159 = vadd.f32 %v982, %v1103
        %v1160 = vadd.f32 %v983, %v1106
        %v1161 = vadd.f32 %v984, %v1111
        %v1162 = vadd.f32 %v985, %v1114
        %v1163 = vadd.f32 %v986, %v1119
        %v1164 = vadd.f32 %v987, %v1122
        %v1165 = vadd.f32 %v988, %v1127
        %v1166 = vadd.f32 %v989, %v1130
        %v1167 = vadd.f32 %v990, %v1135
        %v1168 = vadd.f32 %v991, %v1138
        %v1169 = vadd.f32 %v992, %v1143
        %v1170 = vadd.f32 %v993, %v1146
        %v1171 = vadd.f32 %v994, %v1151
        %v1172 = vadd.f32 %v995, %v1154
        %1173 = vst [vmem:[%s260] sm:$0xff] %v1157
        %1174 = vst [vmem:[%s260 + $0x8] sm:$0xff] %v1158
        %1175 = vst [vmem:[%s260 + $0x10] sm:$0xff] %v1159
        %1176 = vst [vmem:[%s260 + $0x18] sm:$0xff] %v1160
        %1177 = vst [vmem:[%s260 + $0x20] sm:$0xff] %v1161
        %1178 = vst [vmem:[%s260 + $0x28] sm:$0xff] %v1162
        %1179 = vst [vmem:[%s260 + $0x30] sm:$0xff] %v1163
        %1180 = vst [vmem:[%s260 + $0x38] sm:$0xff] %v1164
        %1181 = vst [vmem:[%s260 + $0x40] sm:$0xff] %v1165
        %1182 = vst [vmem:[%s260 + $0x48] sm:$0xff] %v1166
        %1183 = vst [vmem:[%s260 + $0x50] sm:$0xff] %v1167
        %1184 = vst [vmem:[%s260 + $0x58] sm:$0xff] %v1168
        %1185 = vst [vmem:[%s260 + $0x60] sm:$0xff] %v1169
        %1186 = vst [vmem:[%s260 + $0x68] sm:$0xff] %v1170
        %1187 = vst [vmem:[%s260 + $0x70] sm:$0xff] %v1171
        %1188 = vst [vmem:[%s260 + $0x78] sm:$0xff] %v1172
        %v1189 = vld [vmem:[%s267] sm:$0xff]
        %v1190 = vld [vmem:[%s267 + $0x8] sm:$0xff]
        %v1191 = vld [vmem:[%s267 + $0x10] sm:$0xff]
        %v1192 = vld [vmem:[%s267 + $0x18] sm:$0xff]
        %v1193 = vld [vmem:[%s267 + $0x20] sm:$0xff]
        %v1194 = vld [vmem:[%s267 + $0x28] sm:$0xff]
        %v1195 = vld [vmem:[%s267 + $0x30] sm:$0xff]
        %v1196 = vld [vmem:[%s267 + $0x38] sm:$0xff]
        %v1197 = vld [vmem:[%s267 + $0x40] sm:$0xff]
        %v1198 = vld [vmem:[%s267 + $0x48] sm:$0xff]
        %v1199 = vld [vmem:[%s267 + $0x50] sm:$0xff]
        %v1200 = vld [vmem:[%s267 + $0x58] sm:$0xff]
        %v1201 = vld [vmem:[%s267 + $0x60] sm:$0xff]
        %v1202 = vld [vmem:[%s267 + $0x68] sm:$0xff]
        %v1203 = vld [vmem:[%s267 + $0x70] sm:$0xff]
        %v1204 = vld [vmem:[%s267 + $0x78] sm:$0xff]
        %v1221 = vunpack.c.l.b16 %v964
        %v1222 = vunpack.c.l.b16 %v965
        %v1223 = vunpack.c.l.b16 %v966
        %v1224 = vunpack.c.l.b16 %v967
        %v1225 = vunpack.c.l.b16 %v968
        %v1226 = vunpack.c.l.b16 %v969
        %v1227 = vunpack.c.l.b16 %v970
        %v1228 = vunpack.c.l.b16 %v971
        %v1229 = vunpack.c.l.b16 %v972
        %v1230 = vunpack.c.l.b16 %v973
        %v1231 = vunpack.c.l.b16 %v974
        %v1232 = vunpack.c.l.b16 %v975
        %v1233 = vunpack.c.l.b16 %v976
        %v1234 = vunpack.c.l.b16 %v977
        %v1235 = vunpack.c.l.b16 %v978
        %v1236 = vunpack.c.l.b16 %v979
        %v1237 = vpack.c.b16 %v1222, %v1221
        %v1238 = vpack.c.b16 %v1224, %v1223
        %v1239 = vpack.c.b16 %v1226, %v1225
        %v1240 = vpack.c.b16 %v1228, %v1227
        %v1241 = vpack.c.b16 %v1230, %v1229
        %v1242 = vpack.c.b16 %v1232, %v1231
        %v1243 = vpack.c.b16 %v1234, %v1233
        %v1244 = vpack.c.b16 %v1236, %v1235
        %1253 = vmatprep.subr.bf16.mxu0 0
        %1254 = vmatpush1.bf16.msra.mxu0 %v1244
        %1255 = vmatprep.subr.bf16.mxu0 0
        %1256 = vmatpush1.bf16.msra.mxu0 %v1243
        %1257 = vmatprep.subr.bf16.mxu0 0
        %1258 = vmatpush1.bf16.msra.mxu0 %v1242
        %1259 = vmatprep.subr.bf16.mxu0 0
        %1260 = vmatpush1.bf16.msra.mxu0 %v1241
        %1261 = vmatprep.subr.bf16.mxu0 0
        %1262 = vmatpush1.bf16.msra.mxu0 %v1240
        %1263 = vmatprep.subr.bf16.mxu0 0
        %1264 = vmatpush1.bf16.msra.mxu0 %v1239
        %1265 = vmatprep.subr.bf16.mxu0 0
        %1266 = vmatpush1.bf16.msra.mxu0 %v1238
        %1267 = vmatprep.subr.bf16.mxu0 0
        %1268 = vmatpush1.bf16.msra.mxu0 %v1237
        %1269 = vmatprep.subr.bf16.mxu0 0
        %1270 = vmatpush2.bf16.msra.mxu0 0
        %1271 = vmatprep.subr.bf16.mxu0 0
        %1272 = vmatpush2.bf16.msra.mxu0 0
        %1273 = vmatprep.subr.bf16.mxu0 0
        %1274 = vmatpush2.bf16.msra.mxu0 0
        %1275 = vmatprep.subr.bf16.mxu0 0
        %1276 = vmatpush2.bf16.msra.mxu0 0
        %1277 = vmatprep.subr.bf16.mxu0 0
        %1278 = vmatpush2.bf16.msra.mxu0 0
        %1279 = vmatprep.subr.bf16.mxu0 0
        %1280 = vmatpush2.bf16.msra.mxu0 0
        %1281 = vmatprep.subr.bf16.mxu0 0
        %1282 = vmatpush2.bf16.msra.mxu0 0
        %1283 = vmatprep.subr.bf16.mxu0 0
        %1284 = vmatpush2.bf16.msra.mxu0 0
        %1285 = vmatprep.mubr.bf16.mxu0 0
        %1286 = vmatmul.mubr.bf16.gmra.mxu0 %v1052
        %v1287 = vpop.f32.mrf.mxu0
        %v1288 = vadd.f32 0.0, %v1287
        %v1289 = vpop.f32.mrf.mxu0
        %v1290 = vpop.f32.mrf.mxu0
        %v1291 = vadd.f32 0.0, %v1290
        %v1292 = vpop.f32.mrf.mxu0
        %1293 = vmatprep.mubr.bf16.mxu0 0
        %1294 = vmatmul.mubr.bf16.gmra.mxu0 %v1053
        %v1295 = vpop.f32.mrf.mxu0
        %v1296 = vadd.f32 0.0, %v1295
        %v1297 = vpop.f32.mrf.mxu0
        %v1298 = vpop.f32.mrf.mxu0
        %v1299 = vadd.f32 0.0, %v1298
        %v1300 = vpop.f32.mrf.mxu0
        %1301 = vmatprep.mubr.bf16.mxu0 0
        %1302 = vmatmul.mubr.bf16.gmra.mxu0 %v1054
        %v1303 = vpop.f32.mrf.mxu0
        %v1304 = vadd.f32 0.0, %v1303
        %v1305 = vpop.f32.mrf.mxu0
        %v1306 = vpop.f32.mrf.mxu0
        %v1307 = vadd.f32 0.0, %v1306
        %v1308 = vpop.f32.mrf.mxu0
        %1309 = vmatprep.mubr.bf16.mxu0 0
        %1310 = vmatmul.mubr.bf16.gmra.mxu0 %v1055
        %v1311 = vpop.f32.mrf.mxu0
        %v1312 = vadd.f32 0.0, %v1311
        %v1313 = vpop.f32.mrf.mxu0
        %v1314 = vpop.f32.mrf.mxu0
        %v1315 = vadd.f32 0.0, %v1314
        %v1316 = vpop.f32.mrf.mxu0
        %1317 = vmatprep.mubr.bf16.mxu0 0
        %1318 = vmatmul.mubr.bf16.gmra.mxu0 %v1056
        %v1319 = vpop.f32.mrf.mxu0
        %v1320 = vadd.f32 0.0, %v1319
        %v1321 = vpop.f32.mrf.mxu0
        %v1322 = vpop.f32.mrf.mxu0
        %v1323 = vadd.f32 0.0, %v1322
        %v1324 = vpop.f32.mrf.mxu0
        %1325 = vmatprep.mubr.bf16.mxu0 0
        %1326 = vmatmul.mubr.bf16.gmra.mxu0 %v1057
        %v1327 = vpop.f32.mrf.mxu0
        %v1328 = vadd.f32 0.0, %v1327
        %v1329 = vpop.f32.mrf.mxu0
        %v1330 = vpop.f32.mrf.mxu0
        %v1331 = vadd.f32 0.0, %v1330
        %v1332 = vpop.f32.mrf.mxu0
        %1333 = vmatprep.mubr.bf16.mxu0 0
        %1334 = vmatmul.mubr.bf16.gmra.mxu0 %v1058
        %v1335 = vpop.f32.mrf.mxu0
        %v1336 = vadd.f32 0.0, %v1335
        %v1337 = vpop.f32.mrf.mxu0
        %v1338 = vpop.f32.mrf.mxu0
        %v1339 = vadd.f32 0.0, %v1338
        %v1340 = vpop.f32.mrf.mxu0
        %1341 = vmatprep.mubr.bf16.mxu0 0
        %1342 = vmatmul.mubr.bf16.gmra.mxu0 %v1059
        %v1343 = vpop.f32.mrf.mxu0
        %v1344 = vadd.f32 0.0, %v1343
        %v1345 = vpop.f32.mrf.mxu0
        %v1346 = vpop.f32.mrf.mxu0
        %v1347 = vadd.f32 0.0, %v1346
        %v1348 = vpop.f32.mrf.mxu0
        %1349 = vdwg.mxu0
        %v1350 = vadd.f32 %v1189, %v1288
        %v1351 = vadd.f32 %v1190, %v1291
        %v1352 = vadd.f32 %v1191, %v1296
        %v1353 = vadd.f32 %v1192, %v1299
        %v1354 = vadd.f32 %v1193, %v1304
        %v1355 = vadd.f32 %v1194, %v1307
        %v1356 = vadd.f32 %v1195, %v1312
        %v1357 = vadd.f32 %v1196, %v1315
        %v1358 = vadd.f32 %v1197, %v1320
        %v1359 = vadd.f32 %v1198, %v1323
        %v1360 = vadd.f32 %v1199, %v1328
        %v1361 = vadd.f32 %v1200, %v1331
        %v1362 = vadd.f32 %v1201, %v1336
        %v1363 = vadd.f32 %v1202, %v1339
        %v1364 = vadd.f32 %v1203, %v1344
        %v1365 = vadd.f32 %v1204, %v1347
        %1366 = vst [vmem:[%s267] sm:$0xff] %v1350
        %1367 = vst [vmem:[%s267 + $0x8] sm:$0xff] %v1351
        %1368 = vst [vmem:[%s267 + $0x10] sm:$0xff] %v1352
        %1369 = vst [vmem:[%s267 + $0x18] sm:$0xff] %v1353
        %1370 = vst [vmem:[%s267 + $0x20] sm:$0xff] %v1354
        %1371 = vst [vmem:[%s267 + $0x28] sm:$0xff] %v1355
        %1372 = vst [vmem:[%s267 + $0x30] sm:$0xff] %v1356
        %1373 = vst [vmem:[%s267 + $0x38] sm:$0xff] %v1357
        %1374 = vst [vmem:[%s267 + $0x40] sm:$0xff] %v1358
        %1375 = vst [vmem:[%s267 + $0x48] sm:$0xff] %v1359
        %1376 = vst [vmem:[%s267 + $0x50] sm:$0xff] %v1360
        %1377 = vst [vmem:[%s267 + $0x58] sm:$0xff] %v1361
        %1378 = vst [vmem:[%s267 + $0x60] sm:$0xff] %v1362
        %1379 = vst [vmem:[%s267 + $0x68] sm:$0xff] %v1363
        %1380 = vst [vmem:[%s267 + $0x70] sm:$0xff] %v1364
        %1381 = vst [vmem:[%s267 + $0x78] sm:$0xff] %v1365
        %s1382 = sand.u32 %s109, 1
        %s1383 = scalar_lea.sflag [#allocation5], %s1382
        %s1384 = sand.u32 %s109, 1
        %s1385 = smul.addr %s1384, 128
        %s1386 = scalar_lea.vmem [#allocation4], %s1385
        %s1387 = sand.u32 %s135, 1
        %s1388 = scalar_lea.sflag [#allocation7], %s1387
        %s1389 = sand.u32 %s135, 1
        %s1390 = smul.addr %s1389, 128
        %s1391 = scalar_lea.vmem [#allocation6], %s1390
        // Predicated region
        $region33: #{tpu_custom_call.1} parent=27 // pred_check
          %p1392 = pneg %p119
        $region34: #{tpu_custom_call.1} parent=27 // pred_check_branch
          %1394 = sbr.rel (%p1392) target = $region36
        $region35: #{tpu_custom_call.1} parent=27 // pred_region
          %s1396 = ssub.s32 2048, 2048
          %1397 = vsyncadd %s1383, %s1396
          %s1398 = smul.addr %s25, 16
          %s1399 = smul.addr %s1398, 128
          %s1400 = scalar_lea.hbm %s2, %s1399
          %s1401 = sshll.u32 %s1386, 4
          %s1402 = int_to_ptr.vmem [resolvable:$true] %s1401
          %1407 = dma.vmem_to_hbm [thread:$0]  %s1402, 2048, %s1400, %s1383, 128, 128, 8
        $region36: #{tpu_custom_call.1} parent=27 // pred_fallthru
          _
        // Predicated region
        $region37: #{tpu_custom_call.1} parent=27 // pred_check
          %p1408 = pneg %p145
        $region38: #{tpu_custom_call.1} parent=27 // pred_check_branch
          %1410 = sbr.rel (%p1408) target = $region40
        $region39: #{tpu_custom_call.1} parent=27 // pred_region
          %s1412 = ssub.s32 2048, 2048
          %1413 = vsyncadd %s1388, %s1412
          %s1414 = smul.addr %s25, 16
          %s1415 = smul.addr %s1414, 128
          %s1416 = scalar_lea.hbm %s3, %s1415
          %s1417 = sshll.u32 %s1391, 4
          %s1418 = int_to_ptr.vmem [resolvable:$true] %s1417
          %1423 = dma.vmem_to_hbm [thread:$0]  %s1418, 2048, %s1416, %s1388, 128, 128, 8
        $region40: #{tpu_custom_call.1} parent=27 // pred_fallthru
          _
      $region28: #{tpu_custom_call.1} parent=5 // pred_fallthru
        _
      %p1424 = scmp.le.s32.totalorder 2, %s16
      // Predicated region
      $region41: #{tpu_custom_call.1} parent=5 // pred_check
        %p1425 = pneg %p1424
      $region42: #{tpu_custom_call.1} parent=5 // pred_check_branch
        %1427 = sbr.rel (%p1425) target = $region44
      $region43: #{tpu_custom_call.1} parent=5 // pred_region
        %s1428 = ssub.s32 %s16, 2
        // Predicated region
        $region45: #{tpu_custom_call.1} parent=43 // pred_check
          %p1429 = pneg %p125
        $region46: #{tpu_custom_call.1} parent=43 // pred_check_branch
          %1431 = sbr.rel (%p1429) target = $region48
        $region47: #{tpu_custom_call.1} parent=43 // pred_region
          %s1432 = sand.u32 %s110, 1
          %s1433 = scalar_lea.sflag [#allocation5], %s1432
          %s1434 = sand.u32 %s110, 1
          %s1435 = smul.addr %s1434, 128
          %s1436 = scalar_lea.vmem [#allocation4], %s1435
          %1437 = dma.done %s1433, 2048
        $region48: #{tpu_custom_call.1} parent=43 // pred_fallthru
          _
        // Predicated region
        $region49: #{tpu_custom_call.1} parent=43 // pred_check
          %p1438 = pneg %p151
        $region50: #{tpu_custom_call.1} parent=43 // pred_check_branch
          %1440 = sbr.rel (%p1438) target = $region52
        $region51: #{tpu_custom_call.1} parent=43 // pred_region
          %s1441 = sand.u32 %s136, 1
          %s1442 = scalar_lea.sflag [#allocation7], %s1441
          %s1443 = sand.u32 %s136, 1
          %s1444 = smul.addr %s1443, 128
          %s1445 = scalar_lea.vmem [#allocation6], %s1444
          %1446 = dma.done %s1442, 2048
        $region52: #{tpu_custom_call.1} parent=43 // pred_fallthru
          _
      $region44: #{tpu_custom_call.1} parent=5 // pred_fallthru
        _
    $region6: #{tpu_custom_call.1} parent=1 // loop_footer
      %s20 = sadd.s32 1, %s16
    $region7: #{tpu_custom_call.1} parent=1 // loop_footer_branch
      %15 = sbr.rel target = $region3
    $region8: #{tpu_custom_call.1} parent=1 // loop_exit
      _
    %1447 = vsyncpa [#allocation5], 1
    %s1448 = scalar_lea.sflag [#allocation5], 1
    %1449 = vsyncpa %s1448, 1
    %1450 = vsyncpa [#allocation7], 1
    %s1451 = scalar_lea.sflag [#allocation7], 1
    %1452 = vsyncpa %s1451, 1

</llo_original>
